<compile_context>
chip_gen: v6e
topology: v6e:2x2x1
jax: 0.10.0
libtpu: 0.0.40
codegen_flags: <defaults>
</compile_context>

<pallas_src>
import math
import numpy as np
import jax
import jax.numpy as jnp
from jax import lax
from jax.experimental import pallas as pl
from jax.experimental.pallas import tpu as pltpu

LOCAL_SIZE = 5
LOCAL_WEIGHT = 0.5
BN_EPS = 1e-5
_P = LOCAL_SIZE * LOCAL_SIZE           # 25 attention cells
_RESIDENT_HW_LIMIT = 8192              # keep full P2/U2 resident in VMEM up to this padded H*W

_VMEM_LIMIT = None


def _vmem_limit_bytes():
    """Generation-aware VMEM budget: ~100 MiB on 128-MiB parts (v5e/v6e), ~52 MiB on v7x."""
    global _VMEM_LIMIT
    if _VMEM_LIMIT is None:
        try:
            cap = int(pltpu.get_tpu_info().vmem_capacity_bytes)
        except Exception:
            cap = 64 * 1024 * 1024
        _VMEM_LIMIT = int(max(32 * 1024 * 1024,
                              min(cap - 12 * 1024 * 1024, 100 * 1024 * 1024)))
    return _VMEM_LIMIT


# ---------------------------------------------------------------------------
# Parameter / matrix setup (plain-JAX glue)
# ---------------------------------------------------------------------------
def adaptive_pool_matrix(in_size, out_size):
    """Row matrix M (out, in) replicating torch adaptive_avg_pool along one axis."""
    m = np.zeros((out_size, in_size), dtype=np.float32)
    for i in range(out_size):
        start = (i * in_size) // out_size
        end = math.ceil((i + 1) * in_size / out_size)
        m[i, start:end] = 1.0 / (end - start)
    return jnp.asarray(m)


def mlca_kernel_size(c, gamma=2, b=1):
    t = int(abs(math.log(c, 2) + b) / gamma)
    return t if t % 2 else t + 1


def init_params(c, key):
    ks = jax.random.split(key, 12)
    k1d = mlca_kernel_size(c)
    c2 = 2 * c
    # MLCA 1-D conv weights (Conv1d(1,1,k) -> just k taps each)
    w_g = 0.3 * jax.random.normal(ks[0], (k1d,), dtype=jnp.float32)
    w_l = 0.3 * jax.random.normal(ks[1], (k1d,), dtype=jnp.float32)
    # FFN: Conv(c, 2c, 1) + BN + SiLU ; Conv(2c, c, 1) + BN (no act)
    w1 = jax.random.normal(ks[2], (c2, c), dtype=jnp.float32) / math.sqrt(c)
    w2 = jax.random.normal(ks[3], (c, c2), dtype=jnp.float32) / math.sqrt(c2)
    g1 = 1.0 + 0.1 * jax.random.normal(ks[4], (c2,), dtype=jnp.float32)
    b1 = 0.1 * jax.random.normal(ks[5], (c2,), dtype=jnp.float32)
    m1 = 0.1 * jax.random.normal(ks[6], (c2,), dtype=jnp.float32)
    v1 = jax.nn.softplus(jax.random.normal(ks[7], (c2,), dtype=jnp.float32)) + 0.5
    g2 = 1.0 + 0.1 * jax.random.normal(ks[8], (c,), dtype=jnp.float32)
    b2 = 0.1 * jax.random.normal(ks[9], (c,), dtype=jnp.float32)
    m2 = 0.1 * jax.random.normal(ks[10], (c,), dtype=jnp.float32)
    v2 = jax.nn.softplus(jax.random.normal(ks[11], (c,), dtype=jnp.float32)) + 0.5
    # Fold eval-mode BN into the 1x1 convs: y = conv(x)*s + (beta - mean*s)
    s1 = g1 / jnp.sqrt(v1 + BN_EPS)
    s2 = g2 / jnp.sqrt(v2 + BN_EPS)
    return dict(
        w_g=w_g,
        w_l=w_l,
        W1=(w1 * s1[:, None]).T,               # (C, 2C) f32 master copy
        b1=(b1 - m1 * s1)[None, :],            # (1, 2C)
        W2=(w2 * s2[:, None]).T,               # (2C, C)
        b2=(b2 - m2 * s2)[None, :],            # (1, C)
    )


def _choose_tiling(hw, c):
    """Pixel tile and padded H*W.  Never fall back to 128 for multi-tile grids."""
    base = 1024 if c <= 64 else 512
    if hw <= base:
        hw_pad = max(128, ((hw + 127) // 128) * 128)   # single, minimally padded tile
        return hw_pad, hw_pad
    hw_pad = ((hw + base - 1) // base) * base
    return base, hw_pad


# ---------------------------------------------------------------------------
# Pallas kernel 1: adaptive avg-pool (H,W) -> (5,5), as a tiled matmul reduction
# ---------------------------------------------------------------------------
def _pool_kernel(p2_ref, x_ref, o_ref, acc_ref):
    # p2_ref: (T,25,tile) resident  OR  (1,25,tile) streamed, bf16
    # x_ref : (1,tile,C) bf16 ; acc_ref: (25,C) f32 ; o_ref: (1,25,C) f32
    t = pl.program_id(1)

    @pl.when(t == 0)
    def _():
        acc_ref[...] = jnp.zeros_like(acc_ref)

    p2 = p2_ref[t] if p2_ref.shape[0] > 1 else p2_ref[0]        # (25, tile)
    acc_ref[...] += jnp.dot(p2, x_ref[0], preferred_element_type=jnp.float32)

    @pl.when(t == pl.num_programs(1) - 1)
    def _():
        o_ref[0] = acc_ref[...]


def adaptive_pool_to_local(x_pix, p2r, tile):
    B, HWp, C = x_pix.shape
    T, P, _ = p2r.shape
    resident = HWp <= _RESIDENT_HW_LIMIT
    p2_spec = (pl.BlockSpec((T, P, tile), lambda b, t: (0, 0, 0)) if resident
               else pl.BlockSpec((1, P, tile), lambda b, t: (t, 0, 0)))
    cost = pl.CostEstimate(
        flops=2 * B * P * HWp * C,
        transcendentals=0,
        bytes_accessed=B * HWp * C * 2 + P * HWp * 2 + B * P * C * 4)
    return pl.pallas_call(
        _pool_kernel,
        out_shape=jax.ShapeDtypeStruct((B, P, C), jnp.float32),
        grid=(B, HWp // tile),
        in_specs=[
            p2_spec,
            pl.BlockSpec((1, tile, C), lambda b, t: (b, t, 0)),
        ],
        out_specs=pl.BlockSpec((1, P, C), lambda b, t: (b, 0, 0)),
        scratch_shapes=[pltpu.VMEM((P, C), jnp.float32)],
        compiler_params=pltpu.CompilerParams(
            dimension_semantics=("parallel", "arbitrary"),
            vmem_limit_bytes=_vmem_limit_bytes()),
        cost_estimate=cost,
    )(p2r, x_pix)


# ---------------------------------------------------------------------------
# Pallas kernel 2: fused [adaptive upsample of attn map] + attn-apply + shortcut
#                  + FFN (two BN-folded 1x1 convs, SiLU) + shortcut ; bf16 output
# ---------------------------------------------------------------------------
def _fused_kernel(x_ref, u2_ref, att55_ref, w1_ref, b1_ref, w2_ref, b2_ref, o_ref):
    t = pl.program_id(1)
    x = x_ref[0].astype(jnp.float32)                                   # (T, C)
    u2 = u2_ref[t] if u2_ref.shape[0] > 1 else u2_ref[0]               # (T, 25) bf16
    # adaptive_avg_pool2d(att55, [H, W]) restricted to this pixel tile (bf16 MXU, f32 acc)
    att = jnp.dot(u2, att55_ref[0], preferred_element_type=jnp.float32)  # (T, C)
    x1 = x + x * att                                                     # x + MLCA(x), f32
    h = jnp.dot(x1.astype(jnp.bfloat16), w1_ref[...],
                preferred_element_type=jnp.float32) + b1_ref[...]
    h = h * jax.nn.sigmoid(h)                                            # SiLU, f32
    y = jnp.dot(h.astype(jnp.bfloat16), w2_ref[...],
                preferred_element_type=jnp.float32) + b2_ref[...]
    o_ref[0] = (x1 + y).astype(o_ref.dtype)                              # bf16 writeback


def fused_apply_and_ffn(x_pix, u2r, att55, W1, b1, W2, b2, tile):
    B, HWp, C = x_pix.shape
    T, _, P = u2r.shape
    C2 = W1.shape[1]
    resident = HWp <= _RESIDENT_HW_LIMIT
    u2_spec = (pl.BlockSpec((T, tile, P), lambda b, t: (0, 0, 0)) if resident
               else pl.BlockSpec((1, tile, P), lambda b, t: (t, 0, 0)))
    cost = pl.CostEstimate(
        flops=2 * B * HWp * C * (P + 4 * C),
        transcendentals=B * HWp * 2 * C,
        bytes_accessed=2 * B * HWp * C * 2 + HWp * P * 2 + B * P * C * 2 + 4 * C * C * 2)
    return pl.pallas_call(
        _fused_kernel,
        out_shape=jax.ShapeDtypeStruct((B, HWp, C), jnp.bfloat16),
        grid=(B, HWp // tile),
        in_specs=[
            pl.BlockSpec((1, tile, C), lambda b, t: (b, t, 0)),
            u2_spec,
            pl.BlockSpec((1, P, C), lambda b, t: (b, 0, 0)),
            pl.BlockSpec((C, C2), lambda b, t: (0, 0)),
            pl.BlockSpec((1, C2), lambda b, t: (0, 0)),
            pl.BlockSpec((C2, C), lambda b, t: (0, 0)),
            pl.BlockSpec((1, C), lambda b, t: (0, 0)),
        ],
        out_specs=pl.BlockSpec((1, tile, C), lambda b, t: (b, t, 0)),
        compiler_params=pltpu.CompilerParams(
            dimension_semantics=("parallel", "parallel"),
            vmem_limit_bytes=_vmem_limit_bytes()),
        cost_estimate=cost,
    )(x_pix, u2r, att55, W1, b1, W2, b2)


# ---------------------------------------------------------------------------
# MLCA 5x5 attention map (tiny per-batch k-tap 1-D convs -> plain JAX glue)
# ---------------------------------------------------------------------------
def conv1d_same(x, w):
    """x: (B, L), w: (k,) -- matches torch Conv1d(1,1,k,padding=(k-1)//2,bias=False)."""
    pad = (w.shape[0] - 1) // 2
    y = lax.conv_general_dilated(
        x[:, None, :].astype(jnp.float32), w[None, None, :].astype(jnp.float32),
        window_strides=(1,), padding=[(pad, pad)],
        dimension_numbers=("NCH", "OIH", "NCH"))
    return y[:, 0, :]


def mlca_att55(local55, w_g, w_l):
    # local55: (B, 25, C); flattened ordering (pos*C + ch) matches
    # temp_local = local.view(b, c, 25).transpose(-1, -2).reshape(b, 1, -1)
    B, P, C = local55.shape
    g = jnp.mean(local55, axis=1)                        # global_arv_pool(local_arv)  (B, C)
    y_g = conv1d_same(g, w_g)                            # conv over channel axis
    y_l = conv1d_same(local55.reshape(B, P * C), w_l)    # conv over interleaved (pos, ch)
    att_local = jax.nn.sigmoid(y_l).reshape(B, P, C)
    att_global = jax.nn.sigmoid(y_g)[:, None, :]         # 1x1 -> 5x5 broadcast
    return att_global * (1.0 - LOCAL_WEIGHT) + att_local * LOCAL_WEIGHT


# ---------------------------------------------------------------------------
# Full PSABlock forward (Pallas path)
# ---------------------------------------------------------------------------
def psa_block_forward(x_nchw, params, out_dtype=jnp.float32):
    B, C, H, W = x_nchw.shape
    HW = H * W
    # bf16 before the layout transpose: halves the boundary HBM traffic.
    x_pix = jnp.transpose(x_nchw.astype(jnp.bfloat16), (0, 2, 3, 1)).reshape(B, HW, C)

    P2 = jnp.kron(adaptive_pool_matrix(H, LOCAL_SIZE),
                  adaptive_pool_matrix(W, LOCAL_SIZE))          # (25, HW)  pool (H,W)->(5,5)
    U2 = jnp.kron(adaptive_pool_matrix(LOCAL_SIZE, H),
                  adaptive_pool_matrix(LOCAL_SIZE, W))          # (HW, 25)  pool (5,5)->(H,W)

    tile, HW_pad = _choose_tiling(HW, C)
    if HW_pad != HW:                                            # ragged H*W: zero-pad pixels
        pad = HW_pad - HW
        x_pix = jnp.pad(x_pix, ((0, 0), (0, pad), (0, 0)))
        P2 = jnp.pad(P2, ((0, 0), (0, pad)))                    # zero weight for pad pixels
        U2 = jnp.pad(U2, ((0, pad), (0, 0)))

    # Per-tile pages so the kernels pick their tile by a leading-dim dynamic index.
    T = HW_pad // tile
    P2r = jnp.transpose(P2.reshape(_P, T, tile), (1, 0, 2))     # (T, 25, tile)
    U2r = U2.reshape(T, tile, _P)                               # (T, tile, 25)

    local55 = adaptive_pool_to_local(x_pix, P2r.astype(jnp.bfloat16), tile)    # Pallas kernel 1
    att55 = mlca_att55(local55, params["w_g"], params["w_l"])                  # tiny glue (f32)
    out_pix = fused_apply_and_ffn(
        x_pix, U2r.astype(jnp.bfloat16), att55.astype(jnp.bfloat16),
        params["W1"].astype(jnp.bfloat16), params["b1"],
        params["W2"].astype(jnp.bfloat16), params["b2"], tile)                 # Pallas kernel 2

    out_pix = out_pix[:, :HW, :]                                               # drop pad pixels
    out = jnp.transpose(out_pix.reshape(B, H, W, C), (0, 3, 1, 2))             # bf16 transpose
    return out.astype(out_dtype)


# ---------------------------------------------------------------------------
# Pure-JAX reference (same math, no Pallas).  operand_dtype=bf16 / out_round=bf16
# mimic the kernel's MXU operand casts and bf16 writeback exactly.
# ---------------------------------------------------------------------------
def reference_forward(x_nchw, params, operand_dtype=jnp.float32, out_round=None):
    od = operand_dtype
    B, C, H, W = x_nchw.shape
    HW = H * W
    xp = jnp.transpose(x_nchw, (0, 2, 3, 1)).reshape(B, HW, C)
    P2 = jnp.kron(adaptive_pool_matrix(H, LOCAL_SIZE),
                  adaptive_pool_matrix(W, LOCAL_SIZE))
    U2 = jnp.kron(adaptive_pool_matrix(LOCAL_SIZE, H),
                  adaptive_pool_matrix(LOCAL_SIZE, W))
    xo = xp.astype(od)
    local55 = jnp.einsum("ps,bsc->bpc", P2.astype(od), xo,
                         preferred_element_type=jnp.float32)
    att55 = mlca_att55(local55, params["w_g"], params["w_l"])
    att = jnp.einsum("sp,bpc->bsc", U2.astype(od), att55.astype(od),
                     preferred_element_type=jnp.float32)
    x32 = xo.astype(jnp.float32)
    x1 = x32 + x32 * att
    h = jnp.einsum("bsc,cd->bsd", x1.astype(od), params["W1"].astype(od),
                   preferred_element_type=jnp.float32) + params["b1"]
    h = h * jax.nn.sigmoid(h)
    y = jnp.einsum("bsd,dc->bsc", h.astype(od), params["W2"].astype(od),
                   preferred_element_type=jnp.float32) + params["b2"]
    out = x1 + y
    if out_round is not None:
        out = out.astype(out_round).astype(jnp.float32)
    return jnp.transpose(out.reshape(B, H, W, C), (0, 3, 1, 2))


if __name__ == "__main__":
    key = jax.random.PRNGKey(0)
    forward = jax.jit(psa_block_forward)

    def check(out, ref, atol, rtol, msg):
        excess = float(jnp.max(jnp.abs(out - ref) - (atol + rtol * jnp.abs(ref))))
        assert excess <= 0.0, f"{msg}: tolerance exceeded by {excess}"

    def run_case(B, C, H, W, k):
        kx, kp = jax.random.split(k)
        x = jax.random.normal(kx, (B, C, H, W), dtype=jnp.float32)
        params = init_params(C, kp)

        out = jax.block_until_ready(forward(x, params))
        assert out.shape == (B, C, H, W)

        ref_match = reference_forward(x, params, operand_dtype=jnp.bfloat16,
                                      out_round=jnp.bfloat16)
        ref_f32 = reference_forward(x, params, operand_dtype=jnp.float32)
        # Strict check vs a reference with identical (bf16 operand / f32 acc / bf16 out) numerics.
        check(out, ref_match, 3e-2, 2e-2, "vs bf16-operand reference")
        # Loose fidelity check vs the full-f32 module (bf16 rounding only).
        check(out, ref_f32, 2.5e-1, 6e-2, "vs f32 reference")

    keys = jax.random.split(key, 4)
    run_case(2, 16, 16, 16, keys[0])    # HW=256  -> single 256-pixel tile
    run_case(1, 16, 20, 12, keys[1])    # HW=240  -> padded to one 256-pixel tile (ragged)
    run_case(2, 16, 40, 32, keys[2])    # HW=1280 -> padded to 2048, two 1024-pixel tiles
    run_case(1, 128, 26, 26, keys[3])   # HW=676  -> padded to 1024, two 512-pixel tiles
    print("KERNEL_OK")
</pallas_src>

<mosaic_0001>
module attributes {stable_mosaic.version = 11 : i64} {
  func.func @_pool_kernel(%arg0: i32, %arg1: i32, %arg2: memref<1x25x256xbf16, #tpu.memory_space<vmem>>, %arg3: memref<1x256x16xbf16, #tpu.memory_space<vmem>>, %arg4: memref<1x25x16xf32, #tpu.memory_space<vmem>>, %arg5: memref<25x16xf32, #tpu.memory_space<vmem>>) attributes {dimension_semantics = [#tpu.dimension_semantics<parallel>, #tpu.dimension_semantics<arbitrary>], iteration_bounds = array<i64: 2, 1>, scalar_prefetch = 0 : i64, scratch_operands = 1 : i64, tpu.core_type = #tpu.core_type<tc>, window_params = [{pipeline_mode = #tpu.pipeline_mode<synchronous>, transform_indices = @transform_0, window_bounds = array<i64: 1, 25, 256>}, {transform_indices = @transform_1, window_bounds = array<i64: 1, 256, 16>}, {transform_indices = @transform_2, window_bounds = array<i64: 1, 25, 16>}]} {
    %c0_i32 = arith.constant 0 : i32
    %0 = arith.cmpi eq, %arg1, %c0_i32 : i32
    %1 = arith.extui %0 : i1 to i32
    %c0_i32_0 = arith.constant 0 : i32
    %2 = arith.cmpi ne, %1, %c0_i32_0 : i32
    scf.if %2 {
      %cst_12 = arith.constant 0.000000e+00 : f32
      %14 = vector.broadcast %cst_12 : f32 to vector<25x16xf32>
      %c0_13 = arith.constant 0 : index
      %c0_14 = arith.constant 0 : index
      %15 = vector.load %arg5[%c0_13, %c0_14] : memref<25x16xf32, #tpu.memory_space<vmem>>, vector<25x16xf32>
      tpu.vector_store %arg5[%c0_13, %c0_14], %14 {strides = array<i32>} : memref<25x16xf32, #tpu.memory_space<vmem>>, vector<25x16xf32>,
    } else {
    }
    %c0 = arith.constant 0 : index
    %c0_1 = arith.constant 0 : index
    %c0_2 = arith.constant 0 : index
    %3 = vector.load %arg2[%c0, %c0_1, %c0_2] : memref<1x25x256xbf16, #tpu.memory_space<vmem>>, vector<1x25x256xbf16>
    %4 = vector.shape_cast %3 : vector<1x25x256xbf16> to vector<25x256xbf16>
    %c0_3 = arith.constant 0 : index
    %c0_4 = arith.constant 0 : index
    %5 = vector.load %arg5[%c0_3, %c0_4] : memref<25x16xf32, #tpu.memory_space<vmem>>, vector<25x16xf32>
    %c0_5 = arith.constant 0 : index
    %c0_6 = arith.constant 0 : index
    %c0_7 = arith.constant 0 : index
    %6 = vector.load %arg3[%c0_5, %c0_6, %c0_7] : memref<1x256x16xbf16, #tpu.memory_space<vmem>>, vector<1x256x16xbf16>
    %7 = vector.shape_cast %6 : vector<1x256x16xbf16> to vector<256x16xbf16>
    %cst = arith.constant dense<0.000000e+00> : vector<25x16xf32>
    %8 = tpu.matmul %4, %7, %cst {dimension_numbers = #tpu.dot_dimension_numbers<[1], [0], [0], [1], [0, 0, 1, 1], [], []>} : vector<25x256xbf16>, vector<256x16xbf16>, vector<25x16xf32> -> vector<25x16xf32>
    %9 = arith.addf %5, %8 : vector<25x16xf32>
    %c0_8 = arith.constant 0 : index
    %c0_9 = arith.constant 0 : index
    %10 = vector.load %arg5[%c0_8, %c0_9] : memref<25x16xf32, #tpu.memory_space<vmem>>, vector<25x16xf32>
    tpu.vector_store %arg5[%c0_8, %c0_9], %9 {strides = array<i32>} : memref<25x16xf32, #tpu.memory_space<vmem>>, vector<25x16xf32>,
    %c0_i32_10 = arith.constant 0 : i32
    %11 = arith.cmpi eq, %arg1, %c0_i32_10 : i32
    %12 = arith.extui %11 : i1 to i32
    %c0_i32_11 = arith.constant 0 : i32
    %13 = arith.cmpi ne, %12, %c0_i32_11 : i32
    scf.if %13 {
      %c0_12 = arith.constant 0 : index
      %c0_13 = arith.constant 0 : index
      %14 = vector.load %arg5[%c0_12, %c0_13] : memref<25x16xf32, #tpu.memory_space<vmem>>, vector<25x16xf32>
      %c0_14 = arith.constant 0 : index
      %c0_15 = arith.constant 0 : index
      %c0_16 = arith.constant 0 : index
      %15 = vector.load %arg4[%c0_14, %c0_15, %c0_16] : memref<1x25x16xf32, #tpu.memory_space<vmem>>, vector<1x25x16xf32>
      %16 = vector.shape_cast %15 : vector<1x25x16xf32> to vector<25x16xf32>
      %17 = vector.shape_cast %14 : vector<25x16xf32> to vector<1x25x16xf32>
      tpu.vector_store %arg4[%c0_14, %c0_15, %c0_16], %17 {strides = array<i32>} : memref<1x25x16xf32, #tpu.memory_space<vmem>>, vector<1x25x16xf32>,
    } else {
    }
    return
  }
  func.func @transform_0(%arg0: i32, %arg1: i32) -> (i32, i32, i32) {
    %c0_i32 = arith.constant 0 : i32
    %c0_i32_0 = arith.constant 0 : i32
    %c0_i32_1 = arith.constant 0 : i32
    %c0_i32_2 = arith.constant 0 : i32
    return %c0_i32, %c0_i32_0, %c0_i32_1 : i32, i32, i32
  }
  func.func @transform_1(%arg0: i32, %arg1: i32) -> (i32, i32, i32) {
    %c0_i32 = arith.constant 0 : i32
    %c0_i32_0 = arith.constant 0 : i32
    return %arg0, %arg1, %c0_i32 : i32, i32, i32
  }
  func.func @transform_2(%arg0: i32, %arg1: i32) -> (i32, i32, i32) {
    %c0_i32 = arith.constant 0 : i32
    %c0_i32_0 = arith.constant 0 : i32
    %c0_i32_1 = arith.constant 0 : i32
    return %arg0, %c0_i32, %c0_i32_0 : i32, i32, i32
  }
}

module attributes {stable_mosaic.version = 11 : i64} {
  func.func @_fused_kernel(%arg0: i32, %arg1: i32, %arg2: memref<1x256x16xbf16, #tpu.memory_space<vmem>>, %arg3: memref<1x256x25xbf16, #tpu.memory_space<vmem>>, %arg4: memref<1x25x16xbf16, #tpu.memory_space<vmem>>, %arg5: memref<16x32xbf16, #tpu.memory_space<vmem>>, %arg6: memref<1x32xf32, #tpu.memory_space<vmem>>, %arg7: memref<32x16xbf16, #tpu.memory_space<vmem>>, %arg8: memref<1x16xf32, #tpu.memory_space<vmem>>, %arg9: memref<1x256x16xbf16, #tpu.memory_space<vmem>>) attributes {dimension_semantics = [#tpu.dimension_semantics<parallel>, #tpu.dimension_semantics<parallel>], iteration_bounds = array<i64: 2, 1>, scalar_prefetch = 0 : i64, scratch_operands = 0 : i64, tpu.core_type = #tpu.core_type<tc>, window_params = [{transform_indices = @transform_0, window_bounds = array<i64: 1, 256, 16>}, {pipeline_mode = #tpu.pipeline_mode<synchronous>, transform_indices = @transform_1, window_bounds = array<i64: 1, 256, 25>}, {transform_indices = @transform_2, window_bounds = array<i64: 1, 25, 16>}, {pipeline_mode = #tpu.pipeline_mode<synchronous>, transform_indices = @transform_3, window_bounds = array<i64: 16, 32>}, {pipeline_mode = #tpu.pipeline_mode<synchronous>, transform_indices = @transform_4, window_bounds = array<i64: 1, 32>}, {pipeline_mode = #tpu.pipeline_mode<synchronous>, transform_indices = @transform_5, window_bounds = array<i64: 32, 16>}, {pipeline_mode = #tpu.pipeline_mode<synchronous>, transform_indices = @transform_6, window_bounds = array<i64: 1, 16>}, {transform_indices = @transform_7, window_bounds = array<i64: 1, 256, 16>}]} {
    %c0 = arith.constant 0 : index
    %c0_0 = arith.constant 0 : index
    %c0_1 = arith.constant 0 : index
    %0 = vector.load %arg2[%c0, %c0_0, %c0_1] : memref<1x256x16xbf16, #tpu.memory_space<vmem>>, vector<1x256x16xbf16>
    %1 = vector.shape_cast %0 : vector<1x256x16xbf16> to vector<256x16xbf16>
    %2 = arith.extf %1 : vector<256x16xbf16> to vector<256x16xf32>
    %c0_2 = arith.constant 0 : index
    %c0_3 = arith.constant 0 : index
    %c0_4 = arith.constant 0 : index
    %3 = vector.load %arg3[%c0_2, %c0_3, %c0_4] : memref<1x256x25xbf16, #tpu.memory_space<vmem>>, vector<1x256x25xbf16>
    %4 = vector.shape_cast %3 : vector<1x256x25xbf16> to vector<256x25xbf16>
    %c0_5 = arith.constant 0 : index
    %c0_6 = arith.constant 0 : index
    %c0_7 = arith.constant 0 : index
    %5 = vector.load %arg4[%c0_5, %c0_6, %c0_7] : memref<1x25x16xbf16, #tpu.memory_space<vmem>>, vector<1x25x16xbf16>
    %6 = vector.shape_cast %5 : vector<1x25x16xbf16> to vector<25x16xbf16>
    %cst = arith.constant dense<0.000000e+00> : vector<256x16xf32>
    %7 = tpu.matmul %4, %6, %cst {dimension_numbers = #tpu.dot_dimension_numbers<[1], [0], [0], [1], [0, 0, 1, 1], [], []>} : vector<256x25xbf16>, vector<25x16xbf16>, vector<256x16xf32> -> vector<256x16xf32>
    %8 = arith.mulf %2, %7 : vector<256x16xf32>
    %9 = arith.addf %2, %8 : vector<256x16xf32>
    %10 = arith.truncf %9 : vector<256x16xf32> to vector<256x16xbf16>
    %c0_8 = arith.constant 0 : index
    %c0_9 = arith.constant 0 : index
    %11 = vector.load %arg5[%c0_8, %c0_9] : memref<16x32xbf16, #tpu.memory_space<vmem>>, vector<16x32xbf16>
    %cst_10 = arith.constant dense<0.000000e+00> : vector<256x32xf32>
    %12 = tpu.matmul %10, %11, %cst_10 {dimension_numbers = #tpu.dot_dimension_numbers<[1], [0], [0], [1], [0, 0, 1, 1], [], []>} : vector<256x16xbf16>, vector<16x32xbf16>, vector<256x32xf32> -> vector<256x32xf32>
    %c0_11 = arith.constant 0 : index
    %c0_12 = arith.constant 0 : index
    %13 = vector.load %arg6[%c0_11, %c0_12] : memref<1x32xf32, #tpu.memory_space<vmem>>, vector<1x32xf32>
    %14 = vector.broadcast %13 : vector<1x32xf32> to vector<256x32xf32>
    %15 = arith.addf %12, %14 : vector<256x32xf32>
    %16 = arith.negf %15 : vector<256x32xf32>
    %17 = math.exp %16 : vector<256x32xf32>
    %cst_13 = arith.constant 1.000000e+00 : f32
    %18 = vector.broadcast %cst_13 : f32 to vector<256x32xf32>
    %19 = arith.addf %18, %17 : vector<256x32xf32>
    %20 = arith.divf %18, %19 : vector<256x32xf32>
    %21 = arith.mulf %15, %20 : vector<256x32xf32>
    %22 = arith.truncf %21 : vector<256x32xf32> to vector<256x32xbf16>
    %c0_14 = arith.constant 0 : index
    %c0_15 = arith.constant 0 : index
    %23 = vector.load %arg7[%c0_14, %c0_15] : memref<32x16xbf16, #tpu.memory_space<vmem>>, vector<32x16xbf16>
    %cst_16 = arith.constant dense<0.000000e+00> : vector<256x16xf32>
    %24 = tpu.matmul %22, %23, %cst_16 {dimension_numbers = #tpu.dot_dimension_numbers<[1], [0], [0], [1], [0, 0, 1, 1], [], []>} : vector<256x32xbf16>, vector<32x16xbf16>, vector<256x16xf32> -> vector<256x16xf32>
    %c0_17 = arith.constant 0 : index
    %c0_18 = arith.constant 0 : index
    %25 = vector.load %arg8[%c0_17, %c0_18] : memref<1x16xf32, #tpu.memory_space<vmem>>, vector<1x16xf32>
    %26 = vector.broadcast %25 : vector<1x16xf32> to vector<256x16xf32>
    %27 = arith.addf %24, %26 : vector<256x16xf32>
    %28 = arith.addf %9, %27 : vector<256x16xf32>
    %29 = arith.truncf %28 : vector<256x16xf32> to vector<256x16xbf16>
    %c0_19 = arith.constant 0 : index
    %c0_20 = arith.constant 0 : index
    %c0_21 = arith.constant 0 : index
    %30 = vector.load %arg9[%c0_19, %c0_20, %c0_21] : memref<1x256x16xbf16, #tpu.memory_space<vmem>>, vector<1x256x16xbf16>
    %31 = vector.shape_cast %30 : vector<1x256x16xbf16> to vector<256x16xbf16>
    %32 = vector.shape_cast %29 : vector<256x16xbf16> to vector<1x256x16xbf16>
    tpu.vector_store %arg9[%c0_19, %c0_20, %c0_21], %32 {strides = array<i32>} : memref<1x256x16xbf16, #tpu.memory_space<vmem>>, vector<1x256x16xbf16>,
    return
  }
  func.func @transform_0(%arg0: i32, %arg1: i32) -> (i32, i32, i32) {
    %c0_i32 = arith.constant 0 : i32
    %c0_i32_0 = arith.constant 0 : i32
    return %arg0, %arg1, %c0_i32 : i32, i32, i32
  }
  func.func @transform_1(%arg0: i32, %arg1: i32) -> (i32, i32, i32) {
    %c0_i32 = arith.constant 0 : i32
    %c0_i32_0 = arith.constant 0 : i32
    %c0_i32_1 = arith.constant 0 : i32
    %c0_i32_2 = arith.constant 0 : i32
    return %c0_i32, %c0_i32_0, %c0_i32_1 : i32, i32, i32
  }
  func.func @transform_2(%arg0: i32, %arg1: i32) -> (i32, i32, i32) {
    %c0_i32 = arith.constant 0 : i32
    %c0_i32_0 = arith.constant 0 : i32
    %c0_i32_1 = arith.constant 0 : i32
    return %arg0, %c0_i32, %c0_i32_0 : i32, i32, i32
  }
  func.func @transform_3(%arg0: i32, %arg1: i32) -> (i32, i32) {
    %c0_i32 = arith.constant 0 : i32
    %c0_i32_0 = arith.constant 0 : i32
    %c0_i32_1 = arith.constant 0 : i32
    return %c0_i32, %c0_i32_0 : i32, i32
  }
  func.func @transform_4(%arg0: i32, %arg1: i32) -> (i32, i32) {
    %c0_i32 = arith.constant 0 : i32
    %c0_i32_0 = arith.constant 0 : i32
    %c0_i32_1 = arith.constant 0 : i32
    return %c0_i32, %c0_i32_0 : i32, i32
  }
  func.func @transform_5(%arg0: i32, %arg1: i32) -> (i32, i32) {
    %c0_i32 = arith.constant 0 : i32
    %c0_i32_0 = arith.constant 0 : i32
    %c0_i32_1 = arith.constant 0 : i32
    return %c0_i32, %c0_i32_0 : i32, i32
  }
  func.func @transform_6(%arg0: i32, %arg1: i32) -> (i32, i32) {
    %c0_i32 = arith.constant 0 : i32
    %c0_i32_0 = arith.constant 0 : i32
    %c0_i32_1 = arith.constant 0 : i32
    return %c0_i32, %c0_i32_0 : i32, i32
  }
  func.func @transform_7(%arg0: i32, %arg1: i32) -> (i32, i32, i32) {
    %c0_i32 = arith.constant 0 : i32
    %c0_i32_0 = arith.constant 0 : i32
    return %arg0, %arg1, %c0_i32 : i32, i32, i32
  }
}

</mosaic_0001>

<llo_original>
// kernel: psa_block_forward.2
$region0: #{psa_block_forward.2}
  #allocation0 [shape = 'u32[]', space=smem, size = 0x4, offset = 0x4, fixed_abs, tag = 'smem constant byte address 0x4 - core index']
  #allocation1 [shape = 'u32[144,128]{1,0:T(1,128)}', space=vmem, size = 0x12000, scoped, tag = 'internal scratch']
  #allocation2 [shape = 'f32[25,16]{1,0:T(8,128)}', space=vmem, size = 0x4000, scoped, tag = 'scratch operand']
  %s0 = inlined_call_operand.vmem [shape: bf16[1,25,256], index: 0, kind: input, shape index: {}]
  %s1 = inlined_call_operand.vmem [shape: bf16[2,256,16], index: 1, kind: input, shape index: {}]
  %s2 = inlined_call_operand.vmem [shape: f32[2,25,16], index: 2, kind: output, shape index: {}]
  %s3 = sld [smem:[#allocation0]]
  $region49: #{psa_block_forward.2} parent=0
    _
  %s5 = ssub.s32 1, %s3
  %s6 = scalar_select 0, %s5, %s3
  loop: start=0, step=1, limit=4
  $region2: #{psa_block_forward.2} parent=0 // loop_pre_header
    _
  $region3: #{psa_block_forward.2} parent=0 // loop_header
    %s8 = sphi 0, %s12
    %p9 = scmp.ge.s32.totalorder %s8, 4
    %s15 = sphi 0, %s27
    %s16 = sphi 0, %s23
    %s17 = sphi 0, %s15
    %s18 = sphi 0, %s16
    %s19 = sphi 0, %s17
    %s20 = sphi 0, %s18
    %s28 = sphi 0, %s28
    %s30 = sphi 0, %s28
    %s31 = sphi 0, %s30
    %s45 = sphi 0, %s31
    %s53 = sphi 0, %s55
    %s56 = sphi 0, %s53
    %s57 = sphi 0, %s56
    %s73 = sphi 0, %s57
    %s79 = sphi 0, %s81
    %s82 = sphi 0, %s79
    %s83 = sphi 0, %s82
    %s99 = sphi 0, %s83
  $region4: #{psa_block_forward.2} parent=0 // loop_header_branch
    %11 = sbr.rel (%p9) target = $region8
  $region5: #{psa_block_forward.2} parent=0 // loop_body
    %s13 = ssub.s32 %s8, 1
    %s14 = ssub.s32 %s8, 2
    %s21 = sadd.s32 1, %s16
    %p22 = scmp.ge.s32.totalorder %s21, 1
    %s23 = scalar_select %p22, 0, %s21
    %s24 = sadd.s32 1, %s15
    %s25 = scalar_select %p22, %s24, %s15
    %p26 = scmp.ge.s32.totalorder %s25, 2
    %s27 = scalar_select %p26, 0, %s25
    %s29 = sadd.s32 %s28, 1
    %p32 = scmp.eq.s32.totalorder %s8, 1
    %p33 = scmp.ne.s32.totalorder %s28, %s30
    %p34 = scmp.eq.s32.totalorder %s8, 0
    %p35 = por %p33, %p34
    %p36 = scmp.ne.s32.totalorder %s28, %s30
    %p37 = scmp.eq.s32.totalorder %s13, 1
    %p38 = por %p36, %p37
    %p39 = scmp.ne.s32.totalorder %s30, %s31
    %p40 = scmp.eq.s32.totalorder %s13, 0
    %p41 = por %p39, %p40
    %p42 = scmp.ne.s32.totalorder %s30, %s31
    %p43 = scmp.eq.s32.totalorder %s14, 1
    %p44 = por %p42, %p43
    %p46 = scmp.ne.s32.totalorder %s31, %s45
    %p47 = scmp.eq.s32.totalorder %s14, 0
    %p48 = por %p46, %p47
    %s49 = ssub.s32 %s15, %s27
    %s50 = ssub.s32 %s16, %s23
    %s51 = sor.u32 %s49, %s50
    %p52 = scmp.eq.s32.totalorder %s51, 0
    %s54 = sadd.s32 %s53, 1
    %s55 = scalar_select %p52, %s53, %s54
    %p58 = pneg %p52
    %p59 = scmp.eq.s32.totalorder %s8, 1
    %p60 = por %p58, %p59
    %p61 = scmp.ne.s32.totalorder %s53, %s56
    %p62 = scmp.eq.s32.totalorder %s8, 0
    %p63 = por %p61, %p62
    %p64 = scmp.ne.s32.totalorder %s53, %s56
    %p65 = scmp.eq.s32.totalorder %s13, 1
    %p66 = por %p64, %p65
    %p67 = scmp.ne.s32.totalorder %s56, %s57
    %p68 = scmp.eq.s32.totalorder %s13, 0
    %p69 = por %p67, %p68
    %p70 = scmp.ne.s32.totalorder %s56, %s57
    %p71 = scmp.eq.s32.totalorder %s14, 1
    %p72 = por %p70, %p71
    %p74 = scmp.ne.s32.totalorder %s57, %s73
    %p75 = scmp.eq.s32.totalorder %s14, 0
    %p76 = por %p74, %p75
    %s77 = ssub.s32 %s15, %s27
    %p78 = scmp.eq.s32.totalorder %s77, 0
    %s80 = sadd.s32 %s79, 1
    %s81 = scalar_select %p78, %s79, %s80
    %p84 = pneg %p78
    %p85 = scmp.eq.s32.totalorder %s8, 1
    %p86 = por %p84, %p85
    %p87 = scmp.ne.s32.totalorder %s79, %s82
    %p88 = scmp.eq.s32.totalorder %s8, 0
    %p89 = por %p87, %p88
    %p90 = scmp.ne.s32.totalorder %s79, %s82
    %p91 = scmp.eq.s32.totalorder %s13, 1
    %p92 = por %p90, %p91
    %p93 = scmp.ne.s32.totalorder %s82, %s83
    %p94 = scmp.eq.s32.totalorder %s13, 0
    %p95 = por %p93, %p94
    %p96 = scmp.ne.s32.totalorder %s82, %s83
    %p97 = scmp.eq.s32.totalorder %s14, 1
    %p98 = por %p96, %p97
    %p100 = scmp.ne.s32.totalorder %s83, %s99
    %p101 = scmp.eq.s32.totalorder %s14, 0
    %p102 = por %p100, %p101
    %p103 = scmp.le.s32.totalorder 1, %s8
    %p104 = scmp.lt.s32.totalorder %s8, 3
    %p105 = pnand %p103, %p104
    %p106 = pneg %p105
    // Predicated region
    $region9: #{psa_block_forward.2} parent=5 // pred_check
      _
    $region10: #{psa_block_forward.2} parent=5 // pred_check_branch
      %108 = sbr.rel (%p105) target = $region12
    $region11: #{psa_block_forward.2} parent=5 // pred_region
      %s109 = ssub.s32 %s8, 1
      // Predicated region
      $region13: #{psa_block_forward.2} parent=11 // pred_check
        %p110 = pneg %p41
      $region14: #{psa_block_forward.2} parent=11 // pred_check_branch
        %112 = sbr.rel (%p110) target = $region16
      $region15: #{psa_block_forward.2} parent=11 // pred_region
        _
      $region16: #{psa_block_forward.2} parent=11 // pred_fallthru
        _
    $region12: #{psa_block_forward.2} parent=5 // pred_fallthru
      _
    %p113 = scmp.lt.s32.totalorder %s8, 2
    // Predicated region
    $region17: #{psa_block_forward.2} parent=5 // pred_check
      %p114 = pneg %p113
    $region18: #{psa_block_forward.2} parent=5 // pred_check_branch
      %116 = sbr.rel (%p114) target = $region20
    $region19: #{psa_block_forward.2} parent=5 // pred_region
      // Predicated region
      $region21: #{psa_block_forward.2} parent=19 // pred_check
        %p117 = pneg %p63
      $region22: #{psa_block_forward.2} parent=19 // pred_check_branch
        %119 = sbr.rel (%p117) target = $region24
      $region23: #{psa_block_forward.2} parent=19 // pred_region
        %s120 = smul.u32 32, %s16
        %p121 = scmp.lt.s32.totalorder %s15, 1
        %s122 = scalar_select %p121, %s15, 1
        %p123 = scmp.lt.s32.totalorder %s120, 31
        %s124 = scalar_select %p123, %s120, 31
        %s125 = smul.addr %s122, 32
        %s126 = sadd.s32 %s124, %s125
        %s127 = smul.addr %s126, 4
        %s128 = scalar_lea.vmem %s1, %s127
        %s129 = smul.u32 32, %s16
      $region24: #{psa_block_forward.2} parent=19 // pred_fallthru
        _
    $region20: #{psa_block_forward.2} parent=5 // pred_fallthru
      _
    %p130 = scmp.le.s32.totalorder 1, %s8
    %p131 = scmp.lt.s32.totalorder %s8, 3
    %p132 = pnand %p130, %p131
    %p133 = pneg %p132
    // Predicated region
    $region25: #{psa_block_forward.2} parent=5 // pred_check
      _
    $region26: #{psa_block_forward.2} parent=5 // pred_check_branch
      %135 = sbr.rel (%p132) target = $region28
    $region27: #{psa_block_forward.2} parent=5 // pred_region
      %s136 = ssub.s32 %s8, 1
      %p137 = pneg %p41
      %p138 = pneg %p38
      %s139 = smul.u32 32, %s18
      %p140 = scmp.lt.s32.totalorder %s17, 1
      %s141 = scalar_select %p140, %s17, 1
      %p142 = scmp.lt.s32.totalorder %s139, 31
      %s143 = scalar_select %p142, %s139, 31
      %s144 = smul.addr %s141, 32
      %s145 = sadd.s32 %s143, %s144
      %s146 = smul.addr %s145, 4
      %s147 = scalar_lea.vmem %s1, %s146
      %p148 = pneg %p69
      %p149 = pneg %p66
      %p150 = pneg %p95
      %p151 = pneg %p92
      %p152 = scmp.lt.s32.totalorder %s17, 1
      %s153 = scalar_select %p152, %s17, 1
      %s154 = smul.addr %s153, 4
      %s155 = smul.addr %s154, 8
      %s156 = scalar_lea.vmem %s2, %s155
      %s157 = smul.u32 32, %s18
      %p158 = scmp.lt.s32.totalorder %s17, 1
      %s159 = scalar_select %p158, %s17, 1
      %p160 = scmp.lt.s32.totalorder %s157, 31
      %s161 = scalar_select %p160, %s157, 31
      %s162 = smul.addr %s159, 32
      %s163 = sadd.s32 %s161, %s162
      %s164 = smul.addr %s163, 4
      %s165 = scalar_lea.vmem %s1, %s164
      %s166 = smul.u32 32, %s18
      %p167 = scmp.lt.s32.totalorder %s17, 1
      %s168 = scalar_select %p167, %s17, 1
      %s169 = smul.addr %s168, 4
      %s170 = smul.addr %s169, 8
      %s171 = scalar_lea.vmem %s2, %s170
      %p173 = scmp.eq.s32.totalorder %s18, 0
      // Predicated region
      $region29: #{psa_block_forward.2} parent=27 // pred_check
        %p174 = pneg %p173
      $region30: #{psa_block_forward.2} parent=27 // pred_check_branch
        %176 = sbr.rel (%p174) target = $region32
      $region31: #{psa_block_forward.2} parent=27 // pred_region
        %vm177 = vcmask 130048
        %178 = vst.msk [vmem:[#allocation2] sm:$0xff] %vm177, 0.0
        %179 = vst.msk [vmem:[#allocation2 + $0x8] sm:$0xff] %vm177, 0.0
        %180 = vst.msk [vmem:[#allocation2 + $0x10] sm:$0xff] %vm177, 0.0
        %vm181 = vcmask 122880
        %182 = vst.msk [vmem:[#allocation2 + $0x18] sm:$0x1] %vm181, 0.0
      $region32: #{psa_block_forward.2} parent=27 // pred_fallthru
        _
      %v183 = vld [vmem:[%s0] sm:$0xff]
      %v184 = vld [vmem:[%s0 + $0x8] sm:$0xff]
      %v185 = vld [vmem:[%s0 + $0x10] sm:$0xff]
      %v186 = vld [vmem:[%s0 + $0x18] sm:$0x11]
      %v187 = vld [vmem:[#allocation2] sm:$0xff]
      %v188 = vld [vmem:[#allocation2 + $0x8] sm:$0xff]
      %v189 = vld [vmem:[#allocation2 + $0x10] sm:$0xff]
      %v190 = vld [vmem:[#allocation2 + $0x18] sm:$0x1]
      %v191 = vld [vmem:[%s165] sm:$0xf]
      %v192 = vld [vmem:[%s165 + $0x4] sm:$0xf]
      %v193 = vld [vmem:[%s165 + $0x8] sm:$0xf]
      %v194 = vld [vmem:[%s165 + $0xc] sm:$0xf]
      %v195 = vld [vmem:[%s165 + $0x10] sm:$0xf]
      %v196 = vld [vmem:[%s165 + $0x14] sm:$0xf]
      %v197 = vld [vmem:[%s165 + $0x18] sm:$0xf]
      %v198 = vld [vmem:[%s165 + $0x1c] sm:$0xf]
      %v199 = vld [vmem:[%s165 + $0x20] sm:$0xf]
      %v200 = vld [vmem:[%s165 + $0x24] sm:$0xf]
      %v201 = vld [vmem:[%s165 + $0x28] sm:$0xf]
      %v202 = vld [vmem:[%s165 + $0x2c] sm:$0xf]
      %v203 = vld [vmem:[%s165 + $0x30] sm:$0xf]
      %v204 = vld [vmem:[%s165 + $0x34] sm:$0xf]
      %v205 = vld [vmem:[%s165 + $0x38] sm:$0xf]
      %v206 = vld [vmem:[%s165 + $0x3c] sm:$0xf]
      %v207 = vld [vmem:[%s165 + $0x40] sm:$0xf]
      %v208 = vld [vmem:[%s165 + $0x44] sm:$0xf]
      %v209 = vld [vmem:[%s165 + $0x48] sm:$0xf]
      %v210 = vld [vmem:[%s165 + $0x4c] sm:$0xf]
      %v211 = vld [vmem:[%s165 + $0x50] sm:$0xf]
      %v212 = vld [vmem:[%s165 + $0x54] sm:$0xf]
      %v213 = vld [vmem:[%s165 + $0x58] sm:$0xf]
      %v214 = vld [vmem:[%s165 + $0x5c] sm:$0xf]
      %v215 = vld [vmem:[%s165 + $0x60] sm:$0xf]
      %v216 = vld [vmem:[%s165 + $0x64] sm:$0xf]
      %v217 = vld [vmem:[%s165 + $0x68] sm:$0xf]
      %v218 = vld [vmem:[%s165 + $0x6c] sm:$0xf]
      %v219 = vld [vmem:[%s165 + $0x70] sm:$0xf]
      %v220 = vld [vmem:[%s165 + $0x74] sm:$0xf]
      %v221 = vld [vmem:[%s165 + $0x78] sm:$0xf]
      %v222 = vld [vmem:[%s165 + $0x7c] sm:$0xf]
      %v227 = vunpack.c.l.b16 %v183
      %v228 = vunpack.c.h.b16 %v183
      %v229 = vunpack.c.l.b16 %v184
      %v230 = vunpack.c.h.b16 %v184
      %v231 = vunpack.c.l.b16 %v185
      %v232 = vunpack.c.h.b16 %v185
      %v233 = vunpack.c.l.b16 %v186
      %v234 = vunpack.c.h.b16 %v186
      %v235 = vpack.c.b16 %v229, %v227
      %v236 = vpack.c.b16 %v230, %v228
      %v237 = vpack.c.b16 %v233, %v231
      %v238 = vpack.c.b16 %v234, %v232
      %v275 = vunpack.c.l.b16 %v191
      %v276 = vunpack.c.l.b16 %v192
      %v277 = vunpack.c.l.b16 %v193
      %v278 = vunpack.c.l.b16 %v194
      %v279 = vunpack.c.l.b16 %v195
      %v280 = vunpack.c.l.b16 %v196
      %v281 = vunpack.c.l.b16 %v197
      %v282 = vunpack.c.l.b16 %v198
      %v283 = vunpack.c.l.b16 %v199
      %v284 = vunpack.c.l.b16 %v200
      %v285 = vunpack.c.l.b16 %v201
      %v286 = vunpack.c.l.b16 %v202
      %v287 = vunpack.c.l.b16 %v203
      %v288 = vunpack.c.l.b16 %v204
      %v289 = vunpack.c.l.b16 %v205
      %v290 = vunpack.c.l.b16 %v206
      %v291 = vunpack.c.l.b16 %v207
      %v292 = vunpack.c.l.b16 %v208
      %v293 = vunpack.c.l.b16 %v209
      %v294 = vunpack.c.l.b16 %v210
      %v295 = vunpack.c.l.b16 %v211
      %v296 = vunpack.c.l.b16 %v212
      %v297 = vunpack.c.l.b16 %v213
      %v298 = vunpack.c.l.b16 %v214
      %v299 = vunpack.c.l.b16 %v215
      %v300 = vunpack.c.l.b16 %v216
      %v301 = vunpack.c.l.b16 %v217
      %v302 = vunpack.c.l.b16 %v218
      %v303 = vunpack.c.l.b16 %v219
      %v304 = vunpack.c.l.b16 %v220
      %v305 = vunpack.c.l.b16 %v221
      %v306 = vunpack.c.l.b16 %v222
      %v307 = vpack.c.b16 %v276, %v275
      %v308 = vpack.c.b16 %v278, %v277
      %v309 = vpack.c.b16 %v280, %v279
      %v310 = vpack.c.b16 %v282, %v281
      %v311 = vpack.c.b16 %v284, %v283
      %v312 = vpack.c.b16 %v286, %v285
      %v313 = vpack.c.b16 %v288, %v287
      %v314 = vpack.c.b16 %v290, %v289
      %v315 = vpack.c.b16 %v292, %v291
      %v316 = vpack.c.b16 %v294, %v293
      %v317 = vpack.c.b16 %v296, %v295
      %v318 = vpack.c.b16 %v298, %v297
      %v319 = vpack.c.b16 %v300, %v299
      %v320 = vpack.c.b16 %v302, %v301
      %v321 = vpack.c.b16 %v304, %v303
      %v322 = vpack.c.b16 %v306, %v305
      %339 = vmatprep.subr.bf16.mxu0 0
      %340 = vmatpush1.bf16.msra.mxu0 %v314
      %341 = vmatprep.subr.bf16.mxu0 0
      %342 = vmatpush1.bf16.msra.mxu0 %v313
      %343 = vmatprep.subr.bf16.mxu0 0
      %344 = vmatpush1.bf16.msra.mxu0 %v312
      %345 = vmatprep.subr.bf16.mxu0 0
      %346 = vmatpush1.bf16.msra.mxu0 %v311
      %347 = vmatprep.subr.bf16.mxu0 0
      %348 = vmatpush1.bf16.msra.mxu0 %v310
      %349 = vmatprep.subr.bf16.mxu0 0
      %350 = vmatpush1.bf16.msra.mxu0 %v309
      %351 = vmatprep.subr.bf16.mxu0 0
      %352 = vmatpush1.bf16.msra.mxu0 %v308
      %353 = vmatprep.subr.bf16.mxu0 0
      %354 = vmatpush1.bf16.msra.mxu0 %v307
      %355 = vmatprep.subr.bf16.mxu0 0
      %356 = vmatpush2.bf16.msra.mxu0 %v322
      %357 = vmatprep.subr.bf16.mxu0 0
      %358 = vmatpush2.bf16.msra.mxu0 %v321
      %359 = vmatprep.subr.bf16.mxu0 0
      %360 = vmatpush2.bf16.msra.mxu0 %v320
      %361 = vmatprep.subr.bf16.mxu0 0
      %362 = vmatpush2.bf16.msra.mxu0 %v319
      %363 = vmatprep.subr.bf16.mxu0 0
      %364 = vmatpush2.bf16.msra.mxu0 %v318
      %365 = vmatprep.subr.bf16.mxu0 0
      %366 = vmatpush2.bf16.msra.mxu0 %v317
      %367 = vmatprep.subr.bf16.mxu0 0
      %368 = vmatpush2.bf16.msra.mxu0 %v316
      %369 = vmatprep.subr.bf16.mxu0 0
      %370 = vmatpush2.bf16.msra.mxu0 %v315
      %371 = vmatprep.mubr.bf16.mxu0 %v236
      %372 = vmatmul.mubr.bf16.gmra.mxu0 %v235
      %v373 = vpop.f32.mrf.mxu0
      %v374 = vadd.f32 0.0, %v373
      %v375 = vpop.f32.mrf.mxu0
      %v376 = vpop.f32.mrf.mxu0
      %v377 = vadd.f32 0.0, %v376
      %v378 = vpop.f32.mrf.mxu0
      %379 = vmatprep.mubr.bf16.mxu0 %v238
      %380 = vmatmul.mubr.bf16.gmra.mxu0 %v237
      %v381 = vpop.f32.mrf.mxu0
      %v382 = vadd.f32 0.0, %v381
      %v383 = vpop.f32.mrf.mxu0
      %v384 = vpop.f32.mrf.mxu0
      %v385 = vadd.f32 0.0, %v384
      %v386 = vpop.f32.mrf.mxu0
      %387 = vdwg.mxu0
      %v388 = vadd.f32 %v187, %v374
      %v389 = vadd.f32 %v188, %v377
      %v390 = vadd.f32 %v189, %v382
      %v391 = vadd.f32 %v190, %v385
      %vm392 = vcmask 130048
      %393 = vst.msk [vmem:[#allocation2] sm:$0xff] %vm392, %v388
      %394 = vst.msk [vmem:[#allocation2 + $0x8] sm:$0xff] %vm392, %v389
      %395 = vst.msk [vmem:[#allocation2 + $0x10] sm:$0xff] %vm392, %v390
      %vm396 = vcmask 122880
      %397 = vst.msk [vmem:[#allocation2 + $0x18] sm:$0x1] %vm396, %v391
      // Predicated region
      $region33: #{psa_block_forward.2} parent=27 // pred_check
        %p398 = pneg %p173
      $region34: #{psa_block_forward.2} parent=27 // pred_check_branch
        %400 = sbr.rel (%p398) target = $region36
      $region35: #{psa_block_forward.2} parent=27 // pred_region
        %v401 = vld [vmem:[#allocation2] sm:$0xff]
        %v402 = vld [vmem:[#allocation2 + $0x8] sm:$0xff]
        %v403 = vld [vmem:[#allocation2 + $0x10] sm:$0xff]
        %v404 = vld [vmem:[#allocation2 + $0x18] sm:$0x1]
        %405 = vst.msk [vmem:[%s171] sm:$0xff] %vm392, %v401
        %406 = vst.msk [vmem:[%s171 + $0x8] sm:$0xff] %vm392, %v402
        %407 = vst.msk [vmem:[%s171 + $0x10] sm:$0xff] %vm392, %v403
        %408 = vst.msk [vmem:[%s171 + $0x18] sm:$0x1] %vm396, %v404
      $region36: #{psa_block_forward.2} parent=27 // pred_fallthru
        _
      %p409 = scmp.lt.s32.totalorder %s17, 1
      %s410 = scalar_select %p409, %s17, 1
      %s411 = smul.addr %s410, 4
      %s412 = smul.addr %s411, 8
      %s413 = scalar_lea.vmem %s2, %s412
      // Predicated region
      $region37: #{psa_block_forward.2} parent=27 // pred_check
        %p414 = pneg %p92
      $region38: #{psa_block_forward.2} parent=27 // pred_check_branch
        %416 = sbr.rel (%p414) target = $region40
      $region39: #{psa_block_forward.2} parent=27 // pred_region
        _
      $region40: #{psa_block_forward.2} parent=27 // pred_fallthru
        _
    $region28: #{psa_block_forward.2} parent=5 // pred_fallthru
      _
    %p417 = scmp.le.s32.totalorder 2, %s8
    // Predicated region
    $region41: #{psa_block_forward.2} parent=5 // pred_check
      %p418 = pneg %p417
    $region42: #{psa_block_forward.2} parent=5 // pred_check_branch
      %420 = sbr.rel (%p418) target = $region44
    $region43: #{psa_block_forward.2} parent=5 // pred_region
      %s421 = ssub.s32 %s8, 2
      // Predicated region
      $region45: #{psa_block_forward.2} parent=43 // pred_check
        %p422 = pneg %p98
      $region46: #{psa_block_forward.2} parent=43 // pred_check_branch
        %424 = sbr.rel (%p422) target = $region48
      $region47: #{psa_block_forward.2} parent=43 // pred_region
        %p425 = scmp.lt.s32.totalorder %s19, 1
        %s426 = scalar_select %p425, %s19, 1
        %s427 = smul.addr %s426, 4
        %s428 = smul.addr %s427, 8
        %s429 = scalar_lea.vmem %s2, %s428
      $region48: #{psa_block_forward.2} parent=43 // pred_fallthru
        _
    $region44: #{psa_block_forward.2} parent=5 // pred_fallthru
      _
  $region6: #{psa_block_forward.2} parent=0 // loop_footer
    %s12 = sadd.s32 1, %s8
  $region7: #{psa_block_forward.2} parent=0 // loop_footer_branch
    %7 = sbr.rel target = $region3
  $region8: #{psa_block_forward.2} parent=0 // loop_exit
    _

// kernel: psa_block_forward.3
$region0: #{psa_block_forward.3}
  #allocation0 [shape = 'u32[]', space=smem, size = 0x4, offset = 0x4, fixed_abs, tag = 'smem constant byte address 0x4 - core index']
  #allocation1 [shape = 'u32[144,128]{1,0:T(1,128)}', space=vmem, size = 0x12000, scoped, tag = 'internal scratch']
  %s0 = inlined_call_operand.vmem [shape: bf16[2,256,16], index: 0, kind: input, shape index: {}]
  %s1 = inlined_call_operand.vmem [shape: bf16[1,256,25], index: 1, kind: input, shape index: {}]
  %s2 = inlined_call_operand.vmem [shape: bf16[2,25,16], index: 2, kind: input, shape index: {}]
  %s3 = inlined_call_operand.vmem [shape: bf16[16,32], index: 3, kind: input, shape index: {}]
  %s4 = inlined_call_operand.vmem [shape: f32[1,32], index: 4, kind: input, shape index: {}]
  %s5 = inlined_call_operand.vmem [shape: bf16[32,16], index: 5, kind: input, shape index: {}]
  %s6 = inlined_call_operand.vmem [shape: f32[1,16], index: 6, kind: input, shape index: {}]
  %s7 = inlined_call_operand.vmem [shape: bf16[2,256,16], index: 7, kind: output, shape index: {}]
  %s8 = sld [smem:[#allocation0]]
  $region61: #{psa_block_forward.3} parent=0
    _
  %s10 = ssub.s32 1, %s8
  %s11 = scalar_select 0, %s10, %s8
  loop: start=0, step=1, limit=4
  $region2: #{psa_block_forward.3} parent=0 // loop_pre_header
    _
  $region3: #{psa_block_forward.3} parent=0 // loop_header
    %s13 = sphi 0, %s17
    %p14 = scmp.ge.s32.totalorder %s13, 4
    %s20 = sphi 0, %s32
    %s21 = sphi 0, %s28
    %s22 = sphi 0, %s20
    %s23 = sphi 0, %s21
    %s24 = sphi 0, %s22
    %s25 = sphi 0, %s23
    %s37 = sphi 0, %s39
    %s40 = sphi 0, %s37
    %s41 = sphi 0, %s40
    %s57 = sphi 0, %s41
    %s61 = sphi 0, %s61
    %s63 = sphi 0, %s61
    %s64 = sphi 0, %s63
    %s78 = sphi 0, %s64
    %s84 = sphi 0, %s86
    %s87 = sphi 0, %s84
    %s88 = sphi 0, %s87
    %s104 = sphi 0, %s88
    %s108 = sphi 0, %s108
    %s110 = sphi 0, %s108
    %s111 = sphi 0, %s110
    %s125 = sphi 0, %s111
    %s129 = sphi 0, %s129
    %s131 = sphi 0, %s129
    %s132 = sphi 0, %s131
    %s146 = sphi 0, %s132
    %s150 = sphi 0, %s150
    %s152 = sphi 0, %s150
    %s153 = sphi 0, %s152
    %s167 = sphi 0, %s153
    %s171 = sphi 0, %s171
    %s173 = sphi 0, %s171
    %s174 = sphi 0, %s173
    %s188 = sphi 0, %s174
    %s196 = sphi 0, %s198
    %s199 = sphi 0, %s196
    %s200 = sphi 0, %s199
    %s216 = sphi 0, %s200
  $region4: #{psa_block_forward.3} parent=0 // loop_header_branch
    %16 = sbr.rel (%p14) target = $region8
  $region5: #{psa_block_forward.3} parent=0 // loop_body
    %s18 = ssub.s32 %s13, 1
    %s19 = ssub.s32 %s13, 2
    %s26 = sadd.s32 1, %s21
    %p27 = scmp.ge.s32.totalorder %s26, 1
    %s28 = scalar_select %p27, 0, %s26
    %s29 = sadd.s32 1, %s20
    %s30 = scalar_select %p27, %s29, %s20
    %p31 = scmp.ge.s32.totalorder %s30, 2
    %s32 = scalar_select %p31, 0, %s30
    %s33 = ssub.s32 %s20, %s32
    %s34 = ssub.s32 %s21, %s28
    %s35 = sor.u32 %s33, %s34
    %p36 = scmp.eq.s32.totalorder %s35, 0
    %s38 = sadd.s32 %s37, 1
    %s39 = scalar_select %p36, %s37, %s38
    %p42 = pneg %p36
    %p43 = scmp.eq.s32.totalorder %s13, 1
    %p44 = por %p42, %p43
    %p45 = scmp.ne.s32.totalorder %s37, %s40
    %p46 = scmp.eq.s32.totalorder %s13, 0
    %p47 = por %p45, %p46
    %p48 = scmp.ne.s32.totalorder %s37, %s40
    %p49 = scmp.eq.s32.totalorder %s18, 1
    %p50 = por %p48, %p49
    %p51 = scmp.ne.s32.totalorder %s40, %s41
    %p52 = scmp.eq.s32.totalorder %s18, 0
    %p53 = por %p51, %p52
    %p54 = scmp.ne.s32.totalorder %s40, %s41
    %p55 = scmp.eq.s32.totalorder %s19, 1
    %p56 = por %p54, %p55
    %p58 = scmp.ne.s32.totalorder %s41, %s57
    %p59 = scmp.eq.s32.totalorder %s19, 0
    %p60 = por %p58, %p59
    %s62 = sadd.s32 %s61, 1
    %p65 = scmp.eq.s32.totalorder %s13, 1
    %p66 = scmp.ne.s32.totalorder %s61, %s63
    %p67 = scmp.eq.s32.totalorder %s13, 0
    %p68 = por %p66, %p67
    %p69 = scmp.ne.s32.totalorder %s61, %s63
    %p70 = scmp.eq.s32.totalorder %s18, 1
    %p71 = por %p69, %p70
    %p72 = scmp.ne.s32.totalorder %s63, %s64
    %p73 = scmp.eq.s32.totalorder %s18, 0
    %p74 = por %p72, %p73
    %p75 = scmp.ne.s32.totalorder %s63, %s64
    %p76 = scmp.eq.s32.totalorder %s19, 1
    %p77 = por %p75, %p76
    %p79 = scmp.ne.s32.totalorder %s64, %s78
    %p80 = scmp.eq.s32.totalorder %s19, 0
    %p81 = por %p79, %p80
    %s82 = ssub.s32 %s20, %s32
    %p83 = scmp.eq.s32.totalorder %s82, 0
    %s85 = sadd.s32 %s84, 1
    %s86 = scalar_select %p83, %s84, %s85
    %p89 = pneg %p83
    %p90 = scmp.eq.s32.totalorder %s13, 1
    %p91 = por %p89, %p90
    %p92 = scmp.ne.s32.totalorder %s84, %s87
    %p93 = scmp.eq.s32.totalorder %s13, 0
    %p94 = por %p92, %p93
    %p95 = scmp.ne.s32.totalorder %s84, %s87
    %p96 = scmp.eq.s32.totalorder %s18, 1
    %p97 = por %p95, %p96
    %p98 = scmp.ne.s32.totalorder %s87, %s88
    %p99 = scmp.eq.s32.totalorder %s18, 0
    %p100 = por %p98, %p99
    %p101 = scmp.ne.s32.totalorder %s87, %s88
    %p102 = scmp.eq.s32.totalorder %s19, 1
    %p103 = por %p101, %p102
    %p105 = scmp.ne.s32.totalorder %s88, %s104
    %p106 = scmp.eq.s32.totalorder %s19, 0
    %p107 = por %p105, %p106
    %s109 = sadd.s32 %s108, 1
    %p112 = scmp.eq.s32.totalorder %s13, 1
    %p113 = scmp.ne.s32.totalorder %s108, %s110
    %p114 = scmp.eq.s32.totalorder %s13, 0
    %p115 = por %p113, %p114
    %p116 = scmp.ne.s32.totalorder %s108, %s110
    %p117 = scmp.eq.s32.totalorder %s18, 1
    %p118 = por %p116, %p117
    %p119 = scmp.ne.s32.totalorder %s110, %s111
    %p120 = scmp.eq.s32.totalorder %s18, 0
    %p121 = por %p119, %p120
    %p122 = scmp.ne.s32.totalorder %s110, %s111
    %p123 = scmp.eq.s32.totalorder %s19, 1
    %p124 = por %p122, %p123
    %p126 = scmp.ne.s32.totalorder %s111, %s125
    %p127 = scmp.eq.s32.totalorder %s19, 0
    %p128 = por %p126, %p127
    %s130 = sadd.s32 %s129, 1
    %p133 = scmp.eq.s32.totalorder %s13, 1
    %p134 = scmp.ne.s32.totalorder %s129, %s131
    %p135 = scmp.eq.s32.totalorder %s13, 0
    %p136 = por %p134, %p135
    %p137 = scmp.ne.s32.totalorder %s129, %s131
    %p138 = scmp.eq.s32.totalorder %s18, 1
    %p139 = por %p137, %p138
    %p140 = scmp.ne.s32.totalorder %s131, %s132
    %p141 = scmp.eq.s32.totalorder %s18, 0
    %p142 = por %p140, %p141
    %p143 = scmp.ne.s32.totalorder %s131, %s132
    %p144 = scmp.eq.s32.totalorder %s19, 1
    %p145 = por %p143, %p144
    %p147 = scmp.ne.s32.totalorder %s132, %s146
    %p148 = scmp.eq.s32.totalorder %s19, 0
    %p149 = por %p147, %p148
    %s151 = sadd.s32 %s150, 1
    %p154 = scmp.eq.s32.totalorder %s13, 1
    %p155 = scmp.ne.s32.totalorder %s150, %s152
    %p156 = scmp.eq.s32.totalorder %s13, 0
    %p157 = por %p155, %p156
    %p158 = scmp.ne.s32.totalorder %s150, %s152
    %p159 = scmp.eq.s32.totalorder %s18, 1
    %p160 = por %p158, %p159
    %p161 = scmp.ne.s32.totalorder %s152, %s153
    %p162 = scmp.eq.s32.totalorder %s18, 0
    %p163 = por %p161, %p162
    %p164 = scmp.ne.s32.totalorder %s152, %s153
    %p165 = scmp.eq.s32.totalorder %s19, 1
    %p166 = por %p164, %p165
    %p168 = scmp.ne.s32.totalorder %s153, %s167
    %p169 = scmp.eq.s32.totalorder %s19, 0
    %p170 = por %p168, %p169
    %s172 = sadd.s32 %s171, 1
    %p175 = scmp.eq.s32.totalorder %s13, 1
    %p176 = scmp.ne.s32.totalorder %s171, %s173
    %p177 = scmp.eq.s32.totalorder %s13, 0
    %p178 = por %p176, %p177
    %p179 = scmp.ne.s32.totalorder %s171, %s173
    %p180 = scmp.eq.s32.totalorder %s18, 1
    %p181 = por %p179, %p180
    %p182 = scmp.ne.s32.totalorder %s173, %s174
    %p183 = scmp.eq.s32.totalorder %s18, 0
    %p184 = por %p182, %p183
    %p185 = scmp.ne.s32.totalorder %s173, %s174
    %p186 = scmp.eq.s32.totalorder %s19, 1
    %p187 = por %p185, %p186
    %p189 = scmp.ne.s32.totalorder %s174, %s188
    %p190 = scmp.eq.s32.totalorder %s19, 0
    %p191 = por %p189, %p190
    %s192 = ssub.s32 %s20, %s32
    %s193 = ssub.s32 %s21, %s28
    %s194 = sor.u32 %s192, %s193
    %p195 = scmp.eq.s32.totalorder %s194, 0
    %s197 = sadd.s32 %s196, 1
    %s198 = scalar_select %p195, %s196, %s197
    %p201 = pneg %p195
    %p202 = scmp.eq.s32.totalorder %s13, 1
    %p203 = por %p201, %p202
    %p204 = scmp.ne.s32.totalorder %s196, %s199
    %p205 = scmp.eq.s32.totalorder %s13, 0
    %p206 = por %p204, %p205
    %p207 = scmp.ne.s32.totalorder %s196, %s199
    %p208 = scmp.eq.s32.totalorder %s18, 1
    %p209 = por %p207, %p208
    %p210 = scmp.ne.s32.totalorder %s199, %s200
    %p211 = scmp.eq.s32.totalorder %s18, 0
    %p212 = por %p210, %p211
    %p213 = scmp.ne.s32.totalorder %s199, %s200
    %p214 = scmp.eq.s32.totalorder %s19, 1
    %p215 = por %p213, %p214
    %p217 = scmp.ne.s32.totalorder %s200, %s216
    %p218 = scmp.eq.s32.totalorder %s19, 0
    %p219 = por %p217, %p218
    %p220 = scmp.le.s32.totalorder 1, %s13
    %p221 = scmp.lt.s32.totalorder %s13, 3
    %p222 = pnand %p220, %p221
    %p223 = pneg %p222
    // Predicated region
    $region9: #{psa_block_forward.3} parent=5 // pred_check
      _
    $region10: #{psa_block_forward.3} parent=5 // pred_check_branch
      %225 = sbr.rel (%p222) target = $region12
    $region11: #{psa_block_forward.3} parent=5 // pred_region
      %s226 = ssub.s32 %s13, 1
      // Predicated region
      $region13: #{psa_block_forward.3} parent=11 // pred_check
        %p227 = pneg %p74
      $region14: #{psa_block_forward.3} parent=11 // pred_check_branch
        %229 = sbr.rel (%p227) target = $region16
      $region15: #{psa_block_forward.3} parent=11 // pred_region
        _
      $region16: #{psa_block_forward.3} parent=11 // pred_fallthru
        _
      // Predicated region
      $region17: #{psa_block_forward.3} parent=11 // pred_check
        %p230 = pneg %p121
      $region18: #{psa_block_forward.3} parent=11 // pred_check_branch
        %232 = sbr.rel (%p230) target = $region20
      $region19: #{psa_block_forward.3} parent=11 // pred_region
        _
      $region20: #{psa_block_forward.3} parent=11 // pred_fallthru
        _
      // Predicated region
      $region21: #{psa_block_forward.3} parent=11 // pred_check
        %p233 = pneg %p142
      $region22: #{psa_block_forward.3} parent=11 // pred_check_branch
        %235 = sbr.rel (%p233) target = $region24
      $region23: #{psa_block_forward.3} parent=11 // pred_region
        _
      $region24: #{psa_block_forward.3} parent=11 // pred_fallthru
        _
      // Predicated region
      $region25: #{psa_block_forward.3} parent=11 // pred_check
        %p236 = pneg %p163
      $region26: #{psa_block_forward.3} parent=11 // pred_check_branch
        %238 = sbr.rel (%p236) target = $region28
      $region27: #{psa_block_forward.3} parent=11 // pred_region
        _
      $region28: #{psa_block_forward.3} parent=11 // pred_fallthru
        _
      // Predicated region
      $region29: #{psa_block_forward.3} parent=11 // pred_check
        %p239 = pneg %p184
      $region30: #{psa_block_forward.3} parent=11 // pred_check_branch
        %241 = sbr.rel (%p239) target = $region32
      $region31: #{psa_block_forward.3} parent=11 // pred_region
        _
      $region32: #{psa_block_forward.3} parent=11 // pred_fallthru
        _
    $region12: #{psa_block_forward.3} parent=5 // pred_fallthru
      _
    %p242 = scmp.lt.s32.totalorder %s13, 2
    // Predicated region
    $region33: #{psa_block_forward.3} parent=5 // pred_check
      %p243 = pneg %p242
    $region34: #{psa_block_forward.3} parent=5 // pred_check_branch
      %245 = sbr.rel (%p243) target = $region36
    $region35: #{psa_block_forward.3} parent=5 // pred_region
      // Predicated region
      $region37: #{psa_block_forward.3} parent=35 // pred_check
        %p246 = pneg %p47
      $region38: #{psa_block_forward.3} parent=35 // pred_check_branch
        %248 = sbr.rel (%p246) target = $region40
      $region39: #{psa_block_forward.3} parent=35 // pred_region
        %s249 = smul.u32 32, %s21
        %p250 = scmp.lt.s32.totalorder %s20, 1
        %s251 = scalar_select %p250, %s20, 1
        %p252 = scmp.lt.s32.totalorder %s249, 31
        %s253 = scalar_select %p252, %s249, 31
        %s254 = smul.addr %s251, 32
        %s255 = sadd.s32 %s253, %s254
        %s256 = smul.addr %s255, 4
        %s257 = scalar_lea.vmem %s0, %s256
        %s258 = smul.u32 32, %s21
      $region40: #{psa_block_forward.3} parent=35 // pred_fallthru
        _
      // Predicated region
      $region41: #{psa_block_forward.3} parent=35 // pred_check
        %p259 = pneg %p94
      $region42: #{psa_block_forward.3} parent=35 // pred_check_branch
        %261 = sbr.rel (%p259) target = $region44
      $region43: #{psa_block_forward.3} parent=35 // pred_region
        %p262 = scmp.lt.s32.totalorder %s20, 1
        %s263 = scalar_select %p262, %s20, 1
        %s264 = smul.addr %s263, 4
        %s265 = smul.addr %s264, 4
        %s266 = scalar_lea.vmem %s2, %s265
      $region44: #{psa_block_forward.3} parent=35 // pred_fallthru
        _
    $region36: #{psa_block_forward.3} parent=5 // pred_fallthru
      _
    %p267 = scmp.le.s32.totalorder 1, %s13
    %p268 = scmp.lt.s32.totalorder %s13, 3
    %p269 = pnand %p267, %p268
    %p270 = pneg %p269
    // Predicated region
    $region45: #{psa_block_forward.3} parent=5 // pred_check
      _
    $region46: #{psa_block_forward.3} parent=5 // pred_check_branch
      %272 = sbr.rel (%p269) target = $region48
    $region47: #{psa_block_forward.3} parent=5 // pred_region
      %s273 = ssub.s32 %s13, 1
      %s274 = smul.u32 32, %s23
      %p275 = scmp.lt.s32.totalorder %s22, 1
      %s276 = scalar_select %p275, %s22, 1
      %p277 = scmp.lt.s32.totalorder %s274, 31
      %s278 = scalar_select %p277, %s274, 31
      %s279 = smul.addr %s276, 32
      %s280 = sadd.s32 %s278, %s279
      %s281 = smul.addr %s280, 4
      %s282 = scalar_lea.vmem %s0, %s281
      %p283 = pneg %p53
      %p284 = pneg %p50
      %p285 = pneg %p74
      %p286 = pneg %p71
      %p287 = scmp.lt.s32.totalorder %s22, 1
      %s288 = scalar_select %p287, %s22, 1
      %s289 = smul.addr %s288, 4
      %s290 = smul.addr %s289, 4
      %s291 = scalar_lea.vmem %s2, %s290
      %p292 = pneg %p100
      %p293 = pneg %p97
      %p294 = pneg %p121
      %p295 = pneg %p118
      %p296 = pneg %p142
      %p297 = pneg %p139
      %p298 = pneg %p163
      %p299 = pneg %p160
      %p300 = pneg %p184
      %p301 = pneg %p181
      %p302 = pneg %p212
      %p303 = pneg %p209
      %s304 = smul.u32 32, %s23
      %p305 = scmp.lt.s32.totalorder %s22, 1
      %s306 = scalar_select %p305, %s22, 1
      %p307 = scmp.lt.s32.totalorder %s304, 31
      %s308 = scalar_select %p307, %s304, 31
      %s309 = smul.addr %s306, 32
      %s310 = sadd.s32 %s308, %s309
      %s311 = smul.addr %s310, 4
      %s312 = scalar_lea.vmem %s7, %s311
      %s313 = smul.u32 32, %s23
      %p314 = scmp.lt.s32.totalorder %s22, 1
      %s315 = scalar_select %p314, %s22, 1
      %p316 = scmp.lt.s32.totalorder %s313, 31
      %s317 = scalar_select %p316, %s313, 31
      %s318 = smul.addr %s315, 32
      %s319 = sadd.s32 %s317, %s318
      %s320 = smul.addr %s319, 4
      %s321 = scalar_lea.vmem %s0, %s320
      %s322 = smul.u32 32, %s23
      %p323 = scmp.lt.s32.totalorder %s22, 1
      %s324 = scalar_select %p323, %s22, 1
      %s325 = smul.addr %s324, 4
      %s326 = smul.addr %s325, 4
      %s327 = scalar_lea.vmem %s2, %s326
      %s328 = smul.u32 32, %s23
      %p329 = scmp.lt.s32.totalorder %s22, 1
      %s330 = scalar_select %p329, %s22, 1
      %p331 = scmp.lt.s32.totalorder %s328, 31
      %s332 = scalar_select %p331, %s328, 31
      %s333 = smul.addr %s330, 32
      %s334 = sadd.s32 %s332, %s333
      %s335 = smul.addr %s334, 4
      %s336 = scalar_lea.vmem %s7, %s335
      %s337 = smul.u32 32, %s23
      %v339 = vld [vmem:[%s321] sm:$0xf]
      %v340 = vld [vmem:[%s321 + $0x4] sm:$0xf]
      %v341 = vld [vmem:[%s321 + $0x8] sm:$0xf]
      %v342 = vld [vmem:[%s321 + $0xc] sm:$0xf]
      %v343 = vld [vmem:[%s321 + $0x10] sm:$0xf]
      %v344 = vld [vmem:[%s321 + $0x14] sm:$0xf]
      %v345 = vld [vmem:[%s321 + $0x18] sm:$0xf]
      %v346 = vld [vmem:[%s321 + $0x1c] sm:$0xf]
      %v347 = vld [vmem:[%s321 + $0x20] sm:$0xf]
      %v348 = vld [vmem:[%s321 + $0x24] sm:$0xf]
      %v349 = vld [vmem:[%s321 + $0x28] sm:$0xf]
      %v350 = vld [vmem:[%s321 + $0x2c] sm:$0xf]
      %v351 = vld [vmem:[%s321 + $0x30] sm:$0xf]
      %v352 = vld [vmem:[%s321 + $0x34] sm:$0xf]
      %v353 = vld [vmem:[%s321 + $0x38] sm:$0xf]
      %v354 = vld [vmem:[%s321 + $0x3c] sm:$0xf]
      %v355 = vld [vmem:[%s321 + $0x40] sm:$0xf]
      %v356 = vld [vmem:[%s321 + $0x44] sm:$0xf]
      %v357 = vld [vmem:[%s321 + $0x48] sm:$0xf]
      %v358 = vld [vmem:[%s321 + $0x4c] sm:$0xf]
      %v359 = vld [vmem:[%s321 + $0x50] sm:$0xf]
      %v360 = vld [vmem:[%s321 + $0x54] sm:$0xf]
      %v361 = vld [vmem:[%s321 + $0x58] sm:$0xf]
      %v362 = vld [vmem:[%s321 + $0x5c] sm:$0xf]
      %v363 = vld [vmem:[%s321 + $0x60] sm:$0xf]
      %v364 = vld [vmem:[%s321 + $0x64] sm:$0xf]
      %v365 = vld [vmem:[%s321 + $0x68] sm:$0xf]
      %v366 = vld [vmem:[%s321 + $0x6c] sm:$0xf]
      %v367 = vld [vmem:[%s321 + $0x70] sm:$0xf]
      %v368 = vld [vmem:[%s321 + $0x74] sm:$0xf]
      %v369 = vld [vmem:[%s321 + $0x78] sm:$0xf]
      %v370 = vld [vmem:[%s321 + $0x7c] sm:$0xf]
      %v371 = vunpack.c.l.bf16 %v339
      %v372 = vunpack.c.l.bf16 %v340
      %v373 = vunpack.c.l.bf16 %v341
      %v374 = vunpack.c.l.bf16 %v342
      %v375 = vunpack.c.l.bf16 %v343
      %v376 = vunpack.c.l.bf16 %v344
      %v377 = vunpack.c.l.bf16 %v345
      %v378 = vunpack.c.l.bf16 %v346
      %v379 = vunpack.c.l.bf16 %v347
      %v380 = vunpack.c.l.bf16 %v348
      %v381 = vunpack.c.l.bf16 %v349
      %v382 = vunpack.c.l.bf16 %v350
      %v383 = vunpack.c.l.bf16 %v351
      %v384 = vunpack.c.l.bf16 %v352
      %v385 = vunpack.c.l.bf16 %v353
      %v386 = vunpack.c.l.bf16 %v354
      %v387 = vunpack.c.l.bf16 %v355
      %v388 = vunpack.c.l.bf16 %v356
      %v389 = vunpack.c.l.bf16 %v357
      %v390 = vunpack.c.l.bf16 %v358
      %v391 = vunpack.c.l.bf16 %v359
      %v392 = vunpack.c.l.bf16 %v360
      %v393 = vunpack.c.l.bf16 %v361
      %v394 = vunpack.c.l.bf16 %v362
      %v395 = vunpack.c.l.bf16 %v363
      %v396 = vunpack.c.l.bf16 %v364
      %v397 = vunpack.c.l.bf16 %v365
      %v398 = vunpack.c.l.bf16 %v366
      %v399 = vunpack.c.l.bf16 %v367
      %v400 = vunpack.c.l.bf16 %v368
      %v401 = vunpack.c.l.bf16 %v369
      %v402 = vunpack.c.l.bf16 %v370
      %v403 = vld [vmem:[%s1] sm:$0xf]
      %v404 = vld [vmem:[%s1 + $0x4] sm:$0xf]
      %v405 = vld [vmem:[%s1 + $0x8] sm:$0xf]
      %v406 = vld [vmem:[%s1 + $0xc] sm:$0xf]
      %v407 = vld [vmem:[%s1 + $0x10] sm:$0xf]
      %v408 = vld [vmem:[%s1 + $0x14] sm:$0xf]
      %v409 = vld [vmem:[%s1 + $0x18] sm:$0xf]
      %v410 = vld [vmem:[%s1 + $0x1c] sm:$0xf]
      %v411 = vld [vmem:[%s1 + $0x20] sm:$0xf]
      %v412 = vld [vmem:[%s1 + $0x24] sm:$0xf]
      %v413 = vld [vmem:[%s1 + $0x28] sm:$0xf]
      %v414 = vld [vmem:[%s1 + $0x2c] sm:$0xf]
      %v415 = vld [vmem:[%s1 + $0x30] sm:$0xf]
      %v416 = vld [vmem:[%s1 + $0x34] sm:$0xf]
      %v417 = vld [vmem:[%s1 + $0x38] sm:$0xf]
      %v418 = vld [vmem:[%s1 + $0x3c] sm:$0xf]
      %v419 = vld [vmem:[%s1 + $0x40] sm:$0xf]
      %v420 = vld [vmem:[%s1 + $0x44] sm:$0xf]
      %v421 = vld [vmem:[%s1 + $0x48] sm:$0xf]
      %v422 = vld [vmem:[%s1 + $0x4c] sm:$0xf]
      %v423 = vld [vmem:[%s1 + $0x50] sm:$0xf]
      %v424 = vld [vmem:[%s1 + $0x54] sm:$0xf]
      %v425 = vld [vmem:[%s1 + $0x58] sm:$0xf]
      %v426 = vld [vmem:[%s1 + $0x5c] sm:$0xf]
      %v427 = vld [vmem:[%s1 + $0x60] sm:$0xf]
      %v428 = vld [vmem:[%s1 + $0x64] sm:$0xf]
      %v429 = vld [vmem:[%s1 + $0x68] sm:$0xf]
      %v430 = vld [vmem:[%s1 + $0x6c] sm:$0xf]
      %v431 = vld [vmem:[%s1 + $0x70] sm:$0xf]
      %v432 = vld [vmem:[%s1 + $0x74] sm:$0xf]
      %v433 = vld [vmem:[%s1 + $0x78] sm:$0xf]
      %v434 = vld [vmem:[%s1 + $0x7c] sm:$0xf]
      %v435 = vld [vmem:[%s327] sm:$0xf]
      %v436 = vld [vmem:[%s327 + $0x4] sm:$0xf]
      %v437 = vld [vmem:[%s327 + $0x8] sm:$0xf]
      %v438 = vld [vmem:[%s327 + $0xc] sm:$0x1]
      %v471 = vunpack.c.l.b16 %v403
      %v472 = vunpack.c.l.b16 %v404
      %v473 = vunpack.c.l.b16 %v405
      %v474 = vunpack.c.l.b16 %v406
      %v475 = vunpack.c.l.b16 %v407
      %v476 = vunpack.c.l.b16 %v408
      %v477 = vunpack.c.l.b16 %v409
      %v478 = vunpack.c.l.b16 %v410
      %v479 = vunpack.c.l.b16 %v411
      %v480 = vunpack.c.l.b16 %v412
      %v481 = vunpack.c.l.b16 %v413
      %v482 = vunpack.c.l.b16 %v414
      %v483 = vunpack.c.l.b16 %v415
      %v484 = vunpack.c.l.b16 %v416
      %v485 = vunpack.c.l.b16 %v417
      %v486 = vunpack.c.l.b16 %v418
      %v487 = vunpack.c.l.b16 %v419
      %v488 = vunpack.c.l.b16 %v420
      %v489 = vunpack.c.l.b16 %v421
      %v490 = vunpack.c.l.b16 %v422
      %v491 = vunpack.c.l.b16 %v423
      %v492 = vunpack.c.l.b16 %v424
      %v493 = vunpack.c.l.b16 %v425
      %v494 = vunpack.c.l.b16 %v426
      %v495 = vunpack.c.l.b16 %v427
      %v496 = vunpack.c.l.b16 %v428
      %v497 = vunpack.c.l.b16 %v429
      %v498 = vunpack.c.l.b16 %v430
      %v499 = vunpack.c.l.b16 %v431
      %v500 = vunpack.c.l.b16 %v432
      %v501 = vunpack.c.l.b16 %v433
      %v502 = vunpack.c.l.b16 %v434
      %v503 = vpack.c.b16 %v472, %v471
      %v504 = vpack.c.b16 %v474, %v473
      %v505 = vpack.c.b16 %v476, %v475
      %v506 = vpack.c.b16 %v478, %v477
      %v507 = vpack.c.b16 %v480, %v479
      %v508 = vpack.c.b16 %v482, %v481
      %v509 = vpack.c.b16 %v484, %v483
      %v510 = vpack.c.b16 %v486, %v485
      %v511 = vpack.c.b16 %v488, %v487
      %v512 = vpack.c.b16 %v490, %v489
      %v513 = vpack.c.b16 %v492, %v491
      %v514 = vpack.c.b16 %v494, %v493
      %v515 = vpack.c.b16 %v496, %v495
      %v516 = vpack.c.b16 %v498, %v497
      %v517 = vpack.c.b16 %v500, %v499
      %v518 = vpack.c.b16 %v502, %v501
      %v523 = vunpack.c.l.b16 %v435
      %v524 = vunpack.c.l.b16 %v436
      %v525 = vunpack.c.l.b16 %v437
      %v526 = vunpack.c.l.b16 %v438
      %v527 = vpack.c.b16 %v524, %v523
      %v528 = vpack.c.b16 %v526, %v525
      %vm530 = vcmask 203776
      %v532 = vsel %vm530, %v503, 0
      %v535 = vsel %vm530, %v504, 0
      %v538 = vsel %vm530, %v505, 0
      %v541 = vsel %vm530, %v506, 0
      %v544 = vsel %vm530, %v507, 0
      %v547 = vsel %vm530, %v508, 0
      %v550 = vsel %vm530, %v509, 0
      %v553 = vsel %vm530, %v510, 0
      %v556 = vsel %vm530, %v511, 0
      %v559 = vsel %vm530, %v512, 0
      %v562 = vsel %vm530, %v513, 0
      %v565 = vsel %vm530, %v514, 0
      %v568 = vsel %vm530, %v515, 0
      %v571 = vsel %vm530, %v516, 0
      %v574 = vsel %vm530, %v517, 0
      %v577 = vsel %vm530, %v518, 0
      %vm579 = vcmask 1043456
      %vm580 = vcmask 1044480
      %v581 = vsel %vm579, 4294967295, 65535
      %v582 = vsel %vm580, %v581, 0
      %v584 = vand.u32 %v528, %v582
      %586 = vmatprep.subr.bf16.mxu0 0
      %587 = vmatpush1.bf16.msra.mxu0 0
      %588 = vmatprep.subr.bf16.mxu0 0
      %589 = vmatpush1.bf16.msra.mxu0 0
      %590 = vmatprep.subr.bf16.mxu0 0
      %591 = vmatpush1.bf16.msra.mxu0 0
      %592 = vmatprep.subr.bf16.mxu0 0
      %593 = vmatpush1.bf16.msra.mxu0 0
      %594 = vmatprep.subr.bf16.mxu0 0
      %595 = vmatpush1.bf16.msra.mxu0 0
      %596 = vmatprep.subr.bf16.mxu0 0
      %597 = vmatpush1.bf16.msra.mxu0 0
      %598 = vmatprep.subr.bf16.mxu0 0
      %599 = vmatpush1.bf16.msra.mxu0 %v584
      %600 = vmatprep.subr.bf16.mxu0 0
      %601 = vmatpush1.bf16.msra.mxu0 %v527
      %602 = vmatprep.subr.bf16.mxu0 0
      %603 = vmatpush2.bf16.msra.mxu0 0
      %604 = vmatprep.subr.bf16.mxu0 0
      %605 = vmatpush2.bf16.msra.mxu0 0
      %606 = vmatprep.subr.bf16.mxu0 0
      %607 = vmatpush2.bf16.msra.mxu0 0
      %608 = vmatprep.subr.bf16.mxu0 0
      %609 = vmatpush2.bf16.msra.mxu0 0
      %610 = vmatprep.subr.bf16.mxu0 0
      %611 = vmatpush2.bf16.msra.mxu0 0
      %612 = vmatprep.subr.bf16.mxu0 0
      %613 = vmatpush2.bf16.msra.mxu0 0
      %614 = vmatprep.subr.bf16.mxu0 0
      %615 = vmatpush2.bf16.msra.mxu0 0
      %616 = vmatprep.subr.bf16.mxu0 0
      %617 = vmatpush2.bf16.msra.mxu0 0
      %618 = vmatprep.mubr.bf16.mxu0 0
      %619 = vmatmul.mubr.bf16.gmra.mxu0 %v532
      %v620 = vpop.f32.mrf.mxu0
      %v621 = vadd.f32 0.0, %v620
      %v622 = vpop.f32.mrf.mxu0
      %v623 = vpop.f32.mrf.mxu0
      %v624 = vadd.f32 0.0, %v623
      %v625 = vpop.f32.mrf.mxu0
      %626 = vmatprep.mubr.bf16.mxu0 0
      %627 = vmatmul.mubr.bf16.gmra.mxu0 %v535
      %v628 = vpop.f32.mrf.mxu0
      %v629 = vadd.f32 0.0, %v628
      %v630 = vpop.f32.mrf.mxu0
      %v631 = vpop.f32.mrf.mxu0
      %v632 = vadd.f32 0.0, %v631
      %v633 = vpop.f32.mrf.mxu0
      %634 = vmatprep.mubr.bf16.mxu0 0
      %635 = vmatmul.mubr.bf16.gmra.mxu0 %v538
      %v636 = vpop.f32.mrf.mxu0
      %v637 = vadd.f32 0.0, %v636
      %v638 = vpop.f32.mrf.mxu0
      %v639 = vpop.f32.mrf.mxu0
      %v640 = vadd.f32 0.0, %v639
      %v641 = vpop.f32.mrf.mxu0
      %642 = vmatprep.mubr.bf16.mxu0 0
      %643 = vmatmul.mubr.bf16.gmra.mxu0 %v541
      %v644 = vpop.f32.mrf.mxu0
      %v645 = vadd.f32 0.0, %v644
      %v646 = vpop.f32.mrf.mxu0
      %v647 = vpop.f32.mrf.mxu0
      %v648 = vadd.f32 0.0, %v647
      %v649 = vpop.f32.mrf.mxu0
      %650 = vmatprep.mubr.bf16.mxu0 0
      %651 = vmatmul.mubr.bf16.gmra.mxu0 %v544
      %v652 = vpop.f32.mrf.mxu0
      %v653 = vadd.f32 0.0, %v652
      %v654 = vpop.f32.mrf.mxu0
      %v655 = vpop.f32.mrf.mxu0
      %v656 = vadd.f32 0.0, %v655
      %v657 = vpop.f32.mrf.mxu0
      %658 = vmatprep.mubr.bf16.mxu0 0
      %659 = vmatmul.mubr.bf16.gmra.mxu0 %v547
      %v660 = vpop.f32.mrf.mxu0
      %v661 = vadd.f32 0.0, %v660
      %v662 = vpop.f32.mrf.mxu0
      %v663 = vpop.f32.mrf.mxu0
      %v664 = vadd.f32 0.0, %v663
      %v665 = vpop.f32.mrf.mxu0
      %666 = vmatprep.mubr.bf16.mxu0 0
      %667 = vmatmul.mubr.bf16.gmra.mxu0 %v550
      %v668 = vpop.f32.mrf.mxu0
      %v669 = vadd.f32 0.0, %v668
      %v670 = vpop.f32.mrf.mxu0
      %v671 = vpop.f32.mrf.mxu0
      %v672 = vadd.f32 0.0, %v671
      %v673 = vpop.f32.mrf.mxu0
      %674 = vmatprep.mubr.bf16.mxu0 0
      %675 = vmatmul.mubr.bf16.gmra.mxu0 %v553
      %v676 = vpop.f32.mrf.mxu0
      %v677 = vadd.f32 0.0, %v676
      %v678 = vpop.f32.mrf.mxu0
      %v679 = vpop.f32.mrf.mxu0
      %v680 = vadd.f32 0.0, %v679
      %v681 = vpop.f32.mrf.mxu0
      %682 = vmatprep.mubr.bf16.mxu0 0
      %683 = vmatmul.mubr.bf16.gmra.mxu0 %v556
      %v684 = vpop.f32.mrf.mxu0
      %v685 = vadd.f32 0.0, %v684
      %v686 = vpop.f32.mrf.mxu0
      %v687 = vpop.f32.mrf.mxu0
      %v688 = vadd.f32 0.0, %v687
      %v689 = vpop.f32.mrf.mxu0
      %690 = vmatprep.mubr.bf16.mxu0 0
      %691 = vmatmul.mubr.bf16.gmra.mxu0 %v559
      %v692 = vpop.f32.mrf.mxu0
      %v693 = vadd.f32 0.0, %v692
      %v694 = vpop.f32.mrf.mxu0
      %v695 = vpop.f32.mrf.mxu0
      %v696 = vadd.f32 0.0, %v695
      %v697 = vpop.f32.mrf.mxu0
      %698 = vmatprep.mubr.bf16.mxu0 0
      %699 = vmatmul.mubr.bf16.gmra.mxu0 %v562
      %v700 = vpop.f32.mrf.mxu0
      %v701 = vadd.f32 0.0, %v700
      %v702 = vpop.f32.mrf.mxu0
      %v703 = vpop.f32.mrf.mxu0
      %v704 = vadd.f32 0.0, %v703
      %v705 = vpop.f32.mrf.mxu0
      %706 = vmatprep.mubr.bf16.mxu0 0
      %707 = vmatmul.mubr.bf16.gmra.mxu0 %v565
      %v708 = vpop.f32.mrf.mxu0
      %v709 = vadd.f32 0.0, %v708
      %v710 = vpop.f32.mrf.mxu0
      %v711 = vpop.f32.mrf.mxu0
      %v712 = vadd.f32 0.0, %v711
      %v713 = vpop.f32.mrf.mxu0
      %714 = vmatprep.mubr.bf16.mxu0 0
      %715 = vmatmul.mubr.bf16.gmra.mxu0 %v568
      %v716 = vpop.f32.mrf.mxu0
      %v717 = vadd.f32 0.0, %v716
      %v718 = vpop.f32.mrf.mxu0
      %v719 = vpop.f32.mrf.mxu0
      %v720 = vadd.f32 0.0, %v719
      %v721 = vpop.f32.mrf.mxu0
      %722 = vmatprep.mubr.bf16.mxu0 0
      %723 = vmatmul.mubr.bf16.gmra.mxu0 %v571
      %v724 = vpop.f32.mrf.mxu0
      %v725 = vadd.f32 0.0, %v724
      %v726 = vpop.f32.mrf.mxu0
      %v727 = vpop.f32.mrf.mxu0
      %v728 = vadd.f32 0.0, %v727
      %v729 = vpop.f32.mrf.mxu0
      %730 = vmatprep.mubr.bf16.mxu0 0
      %731 = vmatmul.mubr.bf16.gmra.mxu0 %v574
      %v732 = vpop.f32.mrf.mxu0
      %v733 = vadd.f32 0.0, %v732
      %v734 = vpop.f32.mrf.mxu0
      %v735 = vpop.f32.mrf.mxu0
      %v736 = vadd.f32 0.0, %v735
      %v737 = vpop.f32.mrf.mxu0
      %738 = vmatprep.mubr.bf16.mxu0 0
      %739 = vmatmul.mubr.bf16.gmra.mxu0 %v577
      %v740 = vpop.f32.mrf.mxu0
      %v741 = vadd.f32 0.0, %v740
      %v742 = vpop.f32.mrf.mxu0
      %v743 = vpop.f32.mrf.mxu0
      %v744 = vadd.f32 0.0, %v743
      %v745 = vpop.f32.mrf.mxu0
      %746 = vdwg.mxu0
      %v747 = vmul.f32 %v371, %v621
      %v748 = vmul.f32 %v372, %v624
      %v749 = vmul.f32 %v373, %v629
      %v750 = vmul.f32 %v374, %v632
      %v751 = vmul.f32 %v375, %v637
      %v752 = vmul.f32 %v376, %v640
      %v753 = vmul.f32 %v377, %v645
      %v754 = vmul.f32 %v378, %v648
      %v755 = vmul.f32 %v379, %v653
      %v756 = vmul.f32 %v380, %v656
      %v757 = vmul.f32 %v381, %v661
      %v758 = vmul.f32 %v382, %v664
      %v759 = vmul.f32 %v383, %v669
      %v760 = vmul.f32 %v384, %v672
      %v761 = vmul.f32 %v385, %v677
      %v762 = vmul.f32 %v386, %v680
      %v763 = vmul.f32 %v387, %v685
      %v764 = vmul.f32 %v388, %v688
      %v765 = vmul.f32 %v389, %v693
      %v766 = vmul.f32 %v390, %v696
      %v767 = vmul.f32 %v391, %v701
      %v768 = vmul.f32 %v392, %v704
      %v769 = vmul.f32 %v393, %v709
      %v770 = vmul.f32 %v394, %v712
      %v771 = vmul.f32 %v395, %v717
      %v772 = vmul.f32 %v396, %v720
      %v773 = vmul.f32 %v397, %v725
      %v774 = vmul.f32 %v398, %v728
      %v775 = vmul.f32 %v399, %v733
      %v776 = vmul.f32 %v400, %v736
      %v777 = vmul.f32 %v401, %v741
      %v778 = vmul.f32 %v402, %v744
      %v779 = vadd.f32 %v371, %v747
      %v780 = vadd.f32 %v372, %v748
      %v781 = vadd.f32 %v373, %v749
      %v782 = vadd.f32 %v374, %v750
      %v783 = vadd.f32 %v375, %v751
      %v784 = vadd.f32 %v376, %v752
      %v785 = vadd.f32 %v377, %v753
      %v786 = vadd.f32 %v378, %v754
      %v787 = vadd.f32 %v379, %v755
      %v788 = vadd.f32 %v380, %v756
      %v789 = vadd.f32 %v381, %v757
      %v790 = vadd.f32 %v382, %v758
      %v791 = vadd.f32 %v383, %v759
      %v792 = vadd.f32 %v384, %v760
      %v793 = vadd.f32 %v385, %v761
      %v794 = vadd.f32 %v386, %v762
      %v795 = vadd.f32 %v387, %v763
      %v796 = vadd.f32 %v388, %v764
      %v797 = vadd.f32 %v389, %v765
      %v798 = vadd.f32 %v390, %v766
      %v799 = vadd.f32 %v391, %v767
      %v800 = vadd.f32 %v392, %v768
      %v801 = vadd.f32 %v393, %v769
      %v802 = vadd.f32 %v394, %v770
      %v803 = vadd.f32 %v395, %v771
      %v804 = vadd.f32 %v396, %v772
      %v805 = vadd.f32 %v397, %v773
      %v806 = vadd.f32 %v398, %v774
      %v807 = vadd.f32 %v399, %v775
      %v808 = vadd.f32 %v400, %v776
      %v809 = vadd.f32 %v401, %v777
      %v810 = vadd.f32 %v402, %v778
      %v811 = vpack.c.bf16 %v780, %v779
      %v812 = vpack.c.bf16 %v782, %v781
      %v813 = vpack.c.bf16 %v784, %v783
      %v814 = vpack.c.bf16 %v786, %v785
      %v815 = vpack.c.bf16 %v788, %v787
      %v816 = vpack.c.bf16 %v790, %v789
      %v817 = vpack.c.bf16 %v792, %v791
      %v818 = vpack.c.bf16 %v794, %v793
      %v819 = vpack.c.bf16 %v796, %v795
      %v820 = vpack.c.bf16 %v798, %v797
      %v821 = vpack.c.bf16 %v800, %v799
      %v822 = vpack.c.bf16 %v802, %v801
      %v823 = vpack.c.bf16 %v804, %v803
      %v824 = vpack.c.bf16 %v806, %v805
      %v825 = vpack.c.bf16 %v808, %v807
      %v826 = vpack.c.bf16 %v810, %v809
      %v827 = vld [vmem:[%s3] sm:$0xf]
      %v828 = vld [vmem:[%s3 + $0x4] sm:$0xf]
      %v829 = vld [vmem:[%s4] sm:$0x1]
      %v831 = vlaneseq
      %v832 = vshrl.u32 %v831, 7
      %v833 = vsub.s32 0, %v832
      %v834 = vrot.slane %v829, %v833
      %v838 = vunpack.c.l.b16 %v827
      %v839 = vunpack.c.l.b16 %v828
      %v840 = vpack.c.b16 %v839, %v838
      %vm842 = vcmask 130048
      %v844 = vsel %vm842, %v811, 0
      %v847 = vsel %vm842, %v812, 0
      %v850 = vsel %vm842, %v813, 0
      %v853 = vsel %vm842, %v814, 0
      %v856 = vsel %vm842, %v815, 0
      %v859 = vsel %vm842, %v816, 0
      %v862 = vsel %vm842, %v817, 0
      %v865 = vsel %vm842, %v818, 0
      %v868 = vsel %vm842, %v819, 0
      %v871 = vsel %vm842, %v820, 0
      %v874 = vsel %vm842, %v821, 0
      %v877 = vsel %vm842, %v822, 0
      %v880 = vsel %vm842, %v823, 0
      %v883 = vsel %vm842, %v824, 0
      %v886 = vsel %vm842, %v825, 0
      %v889 = vsel %vm842, %v826, 0
      %891 = vmatprep.subr.bf16.mxu0 0
      %892 = vmatpush1.bf16.msra.mxu0 0
      %893 = vmatprep.subr.bf16.mxu0 0
      %894 = vmatpush1.bf16.msra.mxu0 0
      %895 = vmatprep.subr.bf16.mxu0 0
      %896 = vmatpush1.bf16.msra.mxu0 0
      %897 = vmatprep.subr.bf16.mxu0 0
      %898 = vmatpush1.bf16.msra.mxu0 0
      %899 = vmatprep.subr.bf16.mxu0 0
      %900 = vmatpush1.bf16.msra.mxu0 0
      %901 = vmatprep.subr.bf16.mxu0 0
      %902 = vmatpush1.bf16.msra.mxu0 0
      %903 = vmatprep.subr.bf16.mxu0 0
      %904 = vmatpush1.bf16.msra.mxu0 0
      %905 = vmatprep.subr.bf16.mxu0 0
      %906 = vmatpush1.bf16.msra.mxu0 %v840
      %907 = vmatprep.subr.bf16.mxu0 0
      %908 = vmatpush2.bf16.msra.mxu0 0
      %909 = vmatprep.subr.bf16.mxu0 0
      %910 = vmatpush2.bf16.msra.mxu0 0
      %911 = vmatprep.subr.bf16.mxu0 0
      %912 = vmatpush2.bf16.msra.mxu0 0
      %913 = vmatprep.subr.bf16.mxu0 0
      %914 = vmatpush2.bf16.msra.mxu0 0
      %915 = vmatprep.subr.bf16.mxu0 0
      %916 = vmatpush2.bf16.msra.mxu0 0
      %917 = vmatprep.subr.bf16.mxu0 0
      %918 = vmatpush2.bf16.msra.mxu0 0
      %919 = vmatprep.subr.bf16.mxu0 0
      %920 = vmatpush2.bf16.msra.mxu0 0
      %921 = vmatprep.subr.bf16.mxu0 0
      %922 = vmatpush2.bf16.msra.mxu0 0
      %923 = vmatprep.mubr.bf16.mxu0 0
      %924 = vmatmul.mubr.bf16.gmra.mxu0 %v844
      %v925 = vpop.f32.mrf.mxu0
      %v926 = vadd.f32 %v834, %v925
      %v927 = vpop.f32.mrf.mxu0
      %v928 = vpop.f32.mrf.mxu0
      %v929 = vadd.f32 %v834, %v928
      %v930 = vpop.f32.mrf.mxu0
      %931 = vmatprep.mubr.bf16.mxu0 0
      %932 = vmatmul.mubr.bf16.gmra.mxu0 %v847
      %v933 = vpop.f32.mrf.mxu0
      %v934 = vadd.f32 %v834, %v933
      %v935 = vpop.f32.mrf.mxu0
      %v936 = vpop.f32.mrf.mxu0
      %v937 = vadd.f32 %v834, %v936
      %v938 = vpop.f32.mrf.mxu0
      %939 = vmatprep.mubr.bf16.mxu0 0
      %940 = vmatmul.mubr.bf16.gmra.mxu0 %v850
      %v941 = vpop.f32.mrf.mxu0
      %v942 = vadd.f32 %v834, %v941
      %v943 = vpop.f32.mrf.mxu0
      %v944 = vpop.f32.mrf.mxu0
      %v945 = vadd.f32 %v834, %v944
      %v946 = vpop.f32.mrf.mxu0
      %947 = vmatprep.mubr.bf16.mxu0 0
      %948 = vmatmul.mubr.bf16.gmra.mxu0 %v853
      %v949 = vpop.f32.mrf.mxu0
      %v950 = vadd.f32 %v834, %v949
      %v951 = vpop.f32.mrf.mxu0
      %v952 = vpop.f32.mrf.mxu0
      %v953 = vadd.f32 %v834, %v952
      %v954 = vpop.f32.mrf.mxu0
      %955 = vmatprep.mubr.bf16.mxu0 0
      %956 = vmatmul.mubr.bf16.gmra.mxu0 %v856
      %v957 = vpop.f32.mrf.mxu0
      %v958 = vadd.f32 %v834, %v957
      %v959 = vpop.f32.mrf.mxu0
      %v960 = vpop.f32.mrf.mxu0
      %v961 = vadd.f32 %v834, %v960
      %v962 = vpop.f32.mrf.mxu0
      %963 = vmatprep.mubr.bf16.mxu0 0
      %964 = vmatmul.mubr.bf16.gmra.mxu0 %v859
      %v965 = vpop.f32.mrf.mxu0
      %v966 = vadd.f32 %v834, %v965
      %v967 = vpop.f32.mrf.mxu0
      %v968 = vpop.f32.mrf.mxu0
      %v969 = vadd.f32 %v834, %v968
      %v970 = vpop.f32.mrf.mxu0
      %971 = vmatprep.mubr.bf16.mxu0 0
      %972 = vmatmul.mubr.bf16.gmra.mxu0 %v862
      %v973 = vpop.f32.mrf.mxu0
      %v974 = vadd.f32 %v834, %v973
      %v975 = vpop.f32.mrf.mxu0
      %v976 = vpop.f32.mrf.mxu0
      %v977 = vadd.f32 %v834, %v976
      %v978 = vpop.f32.mrf.mxu0
      %979 = vmatprep.mubr.bf16.mxu0 0
      %980 = vmatmul.mubr.bf16.gmra.mxu0 %v865
      %v981 = vpop.f32.mrf.mxu0
      %v982 = vadd.f32 %v834, %v981
      %v983 = vpop.f32.mrf.mxu0
      %v984 = vpop.f32.mrf.mxu0
      %v985 = vadd.f32 %v834, %v984
      %v986 = vpop.f32.mrf.mxu0
      %987 = vmatprep.mubr.bf16.mxu0 0
      %988 = vmatmul.mubr.bf16.gmra.mxu0 %v868
      %v989 = vpop.f32.mrf.mxu0
      %v990 = vadd.f32 %v834, %v989
      %v991 = vpop.f32.mrf.mxu0
      %v992 = vpop.f32.mrf.mxu0
      %v993 = vadd.f32 %v834, %v992
      %v994 = vpop.f32.mrf.mxu0
      %995 = vmatprep.mubr.bf16.mxu0 0
      %996 = vmatmul.mubr.bf16.gmra.mxu0 %v871
      %v997 = vpop.f32.mrf.mxu0
      %v998 = vadd.f32 %v834, %v997
      %v999 = vpop.f32.mrf.mxu0
      %v1000 = vpop.f32.mrf.mxu0
      %v1001 = vadd.f32 %v834, %v1000
      %v1002 = vpop.f32.mrf.mxu0
      %1003 = vmatprep.mubr.bf16.mxu0 0
      %1004 = vmatmul.mubr.bf16.gmra.mxu0 %v874
      %v1005 = vpop.f32.mrf.mxu0
      %v1006 = vadd.f32 %v834, %v1005
      %v1007 = vpop.f32.mrf.mxu0
      %v1008 = vpop.f32.mrf.mxu0
      %v1009 = vadd.f32 %v834, %v1008
      %v1010 = vpop.f32.mrf.mxu0
      %1011 = vmatprep.mubr.bf16.mxu0 0
      %1012 = vmatmul.mubr.bf16.gmra.mxu0 %v877
      %v1013 = vpop.f32.mrf.mxu0
      %v1014 = vadd.f32 %v834, %v1013
      %v1015 = vpop.f32.mrf.mxu0
      %v1016 = vpop.f32.mrf.mxu0
      %v1017 = vadd.f32 %v834, %v1016
      %v1018 = vpop.f32.mrf.mxu0
      %1019 = vmatprep.mubr.bf16.mxu0 0
      %1020 = vmatmul.mubr.bf16.gmra.mxu0 %v880
      %v1021 = vpop.f32.mrf.mxu0
      %v1022 = vadd.f32 %v834, %v1021
      %v1023 = vpop.f32.mrf.mxu0
      %v1024 = vpop.f32.mrf.mxu0
      %v1025 = vadd.f32 %v834, %v1024
      %v1026 = vpop.f32.mrf.mxu0
      %1027 = vmatprep.mubr.bf16.mxu0 0
      %1028 = vmatmul.mubr.bf16.gmra.mxu0 %v883
      %v1029 = vpop.f32.mrf.mxu0
      %v1030 = vadd.f32 %v834, %v1029
      %v1031 = vpop.f32.mrf.mxu0
      %v1032 = vpop.f32.mrf.mxu0
      %v1033 = vadd.f32 %v834, %v1032
      %v1034 = vpop.f32.mrf.mxu0
      %1035 = vmatprep.mubr.bf16.mxu0 0
      %1036 = vmatmul.mubr.bf16.gmra.mxu0 %v886
      %v1037 = vpop.f32.mrf.mxu0
      %v1038 = vadd.f32 %v834, %v1037
      %v1039 = vpop.f32.mrf.mxu0
      %v1040 = vpop.f32.mrf.mxu0
      %v1041 = vadd.f32 %v834, %v1040
      %v1042 = vpop.f32.mrf.mxu0
      %1043 = vmatprep.mubr.bf16.mxu0 0
      %1044 = vmatmul.mubr.bf16.gmra.mxu0 %v889
      %v1045 = vpop.f32.mrf.mxu0
      %v1046 = vadd.f32 %v834, %v1045
      %v1047 = vpop.f32.mrf.mxu0
      %v1048 = vpop.f32.mrf.mxu0
      %v1049 = vadd.f32 %v834, %v1048
      %v1050 = vpop.f32.mrf.mxu0
      %1051 = vdwg.mxu0
      %v1052 = vxor.u32 %v926, 2147483648
      %v1053 = vxor.u32 %v929, 2147483648
      %v1054 = vxor.u32 %v934, 2147483648
      %v1055 = vxor.u32 %v937, 2147483648
      %v1056 = vxor.u32 %v942, 2147483648
      %v1057 = vxor.u32 %v945, 2147483648
      %v1058 = vxor.u32 %v950, 2147483648
      %v1059 = vxor.u32 %v953, 2147483648
      %v1060 = vxor.u32 %v958, 2147483648
      %v1061 = vxor.u32 %v961, 2147483648
      %v1062 = vxor.u32 %v966, 2147483648
      %v1063 = vxor.u32 %v969, 2147483648
      %v1064 = vxor.u32 %v974, 2147483648
      %v1065 = vxor.u32 %v977, 2147483648
      %v1066 = vxor.u32 %v982, 2147483648
      %v1067 = vxor.u32 %v985, 2147483648
      %v1068 = vxor.u32 %v990, 2147483648
      %v1069 = vxor.u32 %v993, 2147483648
      %v1070 = vxor.u32 %v998, 2147483648
      %v1071 = vxor.u32 %v1001, 2147483648
      %v1072 = vxor.u32 %v1006, 2147483648
      %v1073 = vxor.u32 %v1009, 2147483648
      %v1074 = vxor.u32 %v1014, 2147483648
      %v1075 = vxor.u32 %v1017, 2147483648
      %v1076 = vxor.u32 %v1022, 2147483648
      %v1077 = vxor.u32 %v1025, 2147483648
      %v1078 = vxor.u32 %v1030, 2147483648
      %v1079 = vxor.u32 %v1033, 2147483648
      %v1080 = vxor.u32 %v1038, 2147483648
      %v1081 = vxor.u32 %v1041, 2147483648
      %v1082 = vxor.u32 %v1046, 2147483648
      %v1083 = vxor.u32 %v1049, 2147483648
      %v1084 = vmul.f32 %v1052, 1.442695
      %v1085 = vpow.pop %v1084
      %v1086 = vmul.f32 %v1053, 1.442695
      %v1087 = vpow.pop %v1086
      %v1088 = vmul.f32 %v1054, 1.442695
      %v1089 = vpow.pop %v1088
      %v1090 = vmul.f32 %v1055, 1.442695
      %v1091 = vpow.pop %v1090
      %v1092 = vmul.f32 %v1056, 1.442695
      %v1093 = vpow.pop %v1092
      %v1094 = vmul.f32 %v1057, 1.442695
      %v1095 = vpow.pop %v1094
      %v1096 = vmul.f32 %v1058, 1.442695
      %v1097 = vpow.pop %v1096
      %v1098 = vmul.f32 %v1059, 1.442695
      %v1099 = vpow.pop %v1098
      %v1100 = vmul.f32 %v1060, 1.442695
      %v1101 = vpow.pop %v1100
      %v1102 = vmul.f32 %v1061, 1.442695
      %v1103 = vpow.pop %v1102
      %v1104 = vmul.f32 %v1062, 1.442695
      %v1105 = vpow.pop %v1104
      %v1106 = vmul.f32 %v1063, 1.442695
      %v1107 = vpow.pop %v1106
      %v1108 = vmul.f32 %v1064, 1.442695
      %v1109 = vpow.pop %v1108
      %v1110 = vmul.f32 %v1065, 1.442695
      %v1111 = vpow.pop %v1110
      %v1112 = vmul.f32 %v1066, 1.442695
      %v1113 = vpow.pop %v1112
      %v1114 = vmul.f32 %v1067, 1.442695
      %v1115 = vpow.pop %v1114
      %v1116 = vmul.f32 %v1068, 1.442695
      %v1117 = vpow.pop %v1116
      %v1118 = vmul.f32 %v1069, 1.442695
      %v1119 = vpow.pop %v1118
      %v1120 = vmul.f32 %v1070, 1.442695
      %v1121 = vpow.pop %v1120
      %v1122 = vmul.f32 %v1071, 1.442695
      %v1123 = vpow.pop %v1122
      %v1124 = vmul.f32 %v1072, 1.442695
      %v1125 = vpow.pop %v1124
      %v1126 = vmul.f32 %v1073, 1.442695
      %v1127 = vpow.pop %v1126
      %v1128 = vmul.f32 %v1074, 1.442695
      %v1129 = vpow.pop %v1128
      %v1130 = vmul.f32 %v1075, 1.442695
      %v1131 = vpow.pop %v1130
      %v1132 = vmul.f32 %v1076, 1.442695
      %v1133 = vpow.pop %v1132
      %v1134 = vmul.f32 %v1077, 1.442695
      %v1135 = vpow.pop %v1134
      %v1136 = vmul.f32 %v1078, 1.442695
      %v1137 = vpow.pop %v1136
      %v1138 = vmul.f32 %v1079, 1.442695
      %v1139 = vpow.pop %v1138
      %v1140 = vmul.f32 %v1080, 1.442695
      %v1141 = vpow.pop %v1140
      %v1142 = vmul.f32 %v1081, 1.442695
      %v1143 = vpow.pop %v1142
      %v1144 = vmul.f32 %v1082, 1.442695
      %v1145 = vpow.pop %v1144
      %v1146 = vmul.f32 %v1083, 1.442695
      %v1147 = vpow.pop %v1146
      %v1148 = vadd.f32 %v1085, 1.0
      %v1149 = vadd.f32 %v1087, 1.0
      %v1150 = vadd.f32 %v1089, 1.0
      %v1151 = vadd.f32 %v1091, 1.0
      %v1152 = vadd.f32 %v1093, 1.0
      %v1153 = vadd.f32 %v1095, 1.0
      %v1154 = vadd.f32 %v1097, 1.0
      %v1155 = vadd.f32 %v1099, 1.0
      %v1156 = vadd.f32 %v1101, 1.0
      %v1157 = vadd.f32 %v1103, 1.0
      %v1158 = vadd.f32 %v1105, 1.0
      %v1159 = vadd.f32 %v1107, 1.0
      %v1160 = vadd.f32 %v1109, 1.0
      %v1161 = vadd.f32 %v1111, 1.0
      %v1162 = vadd.f32 %v1113, 1.0
      %v1163 = vadd.f32 %v1115, 1.0
      %v1164 = vadd.f32 %v1117, 1.0
      %v1165 = vadd.f32 %v1119, 1.0
      %v1166 = vadd.f32 %v1121, 1.0
      %v1167 = vadd.f32 %v1123, 1.0
      %v1168 = vadd.f32 %v1125, 1.0
      %v1169 = vadd.f32 %v1127, 1.0
      %v1170 = vadd.f32 %v1129, 1.0
      %v1171 = vadd.f32 %v1131, 1.0
      %v1172 = vadd.f32 %v1133, 1.0
      %v1173 = vadd.f32 %v1135, 1.0
      %v1174 = vadd.f32 %v1137, 1.0
      %v1175 = vadd.f32 %v1139, 1.0
      %v1176 = vadd.f32 %v1141, 1.0
      %v1177 = vadd.f32 %v1143, 1.0
      %v1178 = vadd.f32 %v1145, 1.0
      %v1179 = vadd.f32 %v1147, 1.0
      %v1180 = vrcp.pop %v1148
      %v1181 = vmul.f32 1.0, %v1180
      %v1182 = vrcp.pop %v1149
      %v1183 = vmul.f32 1.0, %v1182
      %v1184 = vrcp.pop %v1150
      %v1185 = vmul.f32 1.0, %v1184
      %v1186 = vrcp.pop %v1151
      %v1187 = vmul.f32 1.0, %v1186
      %v1188 = vrcp.pop %v1152
      %v1189 = vmul.f32 1.0, %v1188
      %v1190 = vrcp.pop %v1153
      %v1191 = vmul.f32 1.0, %v1190
      %v1192 = vrcp.pop %v1154
      %v1193 = vmul.f32 1.0, %v1192
      %v1194 = vrcp.pop %v1155
      %v1195 = vmul.f32 1.0, %v1194
      %v1196 = vrcp.pop %v1156
      %v1197 = vmul.f32 1.0, %v1196
      %v1198 = vrcp.pop %v1157
      %v1199 = vmul.f32 1.0, %v1198
      %v1200 = vrcp.pop %v1158
      %v1201 = vmul.f32 1.0, %v1200
      %v1202 = vrcp.pop %v1159
      %v1203 = vmul.f32 1.0, %v1202
      %v1204 = vrcp.pop %v1160
      %v1205 = vmul.f32 1.0, %v1204
      %v1206 = vrcp.pop %v1161
      %v1207 = vmul.f32 1.0, %v1206
      %v1208 = vrcp.pop %v1162
      %v1209 = vmul.f32 1.0, %v1208
      %v1210 = vrcp.pop %v1163
      %v1211 = vmul.f32 1.0, %v1210
      %v1212 = vrcp.pop %v1164
      %v1213 = vmul.f32 1.0, %v1212
      %v1214 = vrcp.pop %v1165
      %v1215 = vmul.f32 1.0, %v1214
      %v1216 = vrcp.pop %v1166
      %v1217 = vmul.f32 1.0, %v1216
      %v1218 = vrcp.pop %v1167
      %v1219 = vmul.f32 1.0, %v1218
      %v1220 = vrcp.pop %v1168
      %v1221 = vmul.f32 1.0, %v1220
      %v1222 = vrcp.pop %v1169
      %v1223 = vmul.f32 1.0, %v1222
      %v1224 = vrcp.pop %v1170
      %v1225 = vmul.f32 1.0, %v1224
      %v1226 = vrcp.pop %v1171
      %v1227 = vmul.f32 1.0, %v1226
      %v1228 = vrcp.pop %v1172
      %v1229 = vmul.f32 1.0, %v1228
      %v1230 = vrcp.pop %v1173
      %v1231 = vmul.f32 1.0, %v1230
      %v1232 = vrcp.pop %v1174
      %v1233 = vmul.f32 1.0, %v1232
      %v1234 = vrcp.pop %v1175
      %v1235 = vmul.f32 1.0, %v1234
      %v1236 = vrcp.pop %v1176
      %v1237 = vmul.f32 1.0, %v1236
      %v1238 = vrcp.pop %v1177
      %v1239 = vmul.f32 1.0, %v1238
      %v1240 = vrcp.pop %v1178
      %v1241 = vmul.f32 1.0, %v1240
      %v1242 = vrcp.pop %v1179
      %v1243 = vmul.f32 1.0, %v1242
      %v1244 = vmul.f32 %v926, %v1181
      %v1245 = vmul.f32 %v929, %v1183
      %v1246 = vmul.f32 %v934, %v1185
      %v1247 = vmul.f32 %v937, %v1187
      %v1248 = vmul.f32 %v942, %v1189
      %v1249 = vmul.f32 %v945, %v1191
      %v1250 = vmul.f32 %v950, %v1193
      %v1251 = vmul.f32 %v953, %v1195
      %v1252 = vmul.f32 %v958, %v1197
      %v1253 = vmul.f32 %v961, %v1199
      %v1254 = vmul.f32 %v966, %v1201
      %v1255 = vmul.f32 %v969, %v1203
      %v1256 = vmul.f32 %v974, %v1205
      %v1257 = vmul.f32 %v977, %v1207
      %v1258 = vmul.f32 %v982, %v1209
      %v1259 = vmul.f32 %v985, %v1211
      %v1260 = vmul.f32 %v990, %v1213
      %v1261 = vmul.f32 %v993, %v1215
      %v1262 = vmul.f32 %v998, %v1217
      %v1263 = vmul.f32 %v1001, %v1219
      %v1264 = vmul.f32 %v1006, %v1221
      %v1265 = vmul.f32 %v1009, %v1223
      %v1266 = vmul.f32 %v1014, %v1225
      %v1267 = vmul.f32 %v1017, %v1227
      %v1268 = vmul.f32 %v1022, %v1229
      %v1269 = vmul.f32 %v1025, %v1231
      %v1270 = vmul.f32 %v1030, %v1233
      %v1271 = vmul.f32 %v1033, %v1235
      %v1272 = vmul.f32 %v1038, %v1237
      %v1273 = vmul.f32 %v1041, %v1239
      %v1274 = vmul.f32 %v1046, %v1241
      %v1275 = vmul.f32 %v1049, %v1243
      %v1276 = vpack.c.bf16 %v1245, %v1244
      %v1277 = vpack.c.bf16 %v1247, %v1246
      %v1278 = vpack.c.bf16 %v1249, %v1248
      %v1279 = vpack.c.bf16 %v1251, %v1250
      %v1280 = vpack.c.bf16 %v1253, %v1252
      %v1281 = vpack.c.bf16 %v1255, %v1254
      %v1282 = vpack.c.bf16 %v1257, %v1256
      %v1283 = vpack.c.bf16 %v1259, %v1258
      %v1284 = vpack.c.bf16 %v1261, %v1260
      %v1285 = vpack.c.bf16 %v1263, %v1262
      %v1286 = vpack.c.bf16 %v1265, %v1264
      %v1287 = vpack.c.bf16 %v1267, %v1266
      %v1288 = vpack.c.bf16 %v1269, %v1268
      %v1289 = vpack.c.bf16 %v1271, %v1270
      %v1290 = vpack.c.bf16 %v1273, %v1272
      %v1291 = vpack.c.bf16 %v1275, %v1274
      %v1292 = vld [vmem:[%s5] sm:$0xf]
      %v1293 = vld [vmem:[%s5 + $0x4] sm:$0xf]
      %v1294 = vld [vmem:[%s5 + $0x8] sm:$0xf]
      %v1295 = vld [vmem:[%s5 + $0xc] sm:$0xf]
      %v1296 = vld [vmem:[%s6] sm:$0x1]
      %v1298 = vlaneseq
      %v1299 = vshrl.u32 %v1298, 7
      %v1300 = vsub.s32 0, %v1299
      %v1301 = vrot.slane %v1296, %v1300
      %v1307 = vunpack.c.l.b16 %v1292
      %v1308 = vunpack.c.l.b16 %v1293
      %v1309 = vunpack.c.l.b16 %v1294
      %v1310 = vunpack.c.l.b16 %v1295
      %v1311 = vpack.c.b16 %v1308, %v1307
      %v1312 = vpack.c.b16 %v1310, %v1309
      %vm1315 = vcmask 261120
      %v1317 = vsel %vm1315, %v1276, 0
      %v1320 = vsel %vm1315, %v1277, 0
      %v1323 = vsel %vm1315, %v1278, 0
      %v1326 = vsel %vm1315, %v1279, 0
      %v1329 = vsel %vm1315, %v1280, 0
      %v1332 = vsel %vm1315, %v1281, 0
      %v1335 = vsel %vm1315, %v1282, 0
      %v1338 = vsel %vm1315, %v1283, 0
      %v1341 = vsel %vm1315, %v1284, 0
      %v1344 = vsel %vm1315, %v1285, 0
      %v1347 = vsel %vm1315, %v1286, 0
      %v1350 = vsel %vm1315, %v1287, 0
      %v1353 = vsel %vm1315, %v1288, 0
      %v1356 = vsel %vm1315, %v1289, 0
      %v1359 = vsel %vm1315, %v1290, 0
      %v1362 = vsel %vm1315, %v1291, 0
      %1364 = vmatprep.subr.bf16.mxu0 0
      %1365 = vmatpush1.bf16.msra.mxu0 0
      %1366 = vmatprep.subr.bf16.mxu0 0
      %1367 = vmatpush1.bf16.msra.mxu0 0
      %1368 = vmatprep.subr.bf16.mxu0 0
      %1369 = vmatpush1.bf16.msra.mxu0 0
      %1370 = vmatprep.subr.bf16.mxu0 0
      %1371 = vmatpush1.bf16.msra.mxu0 0
      %1372 = vmatprep.subr.bf16.mxu0 0
      %1373 = vmatpush1.bf16.msra.mxu0 0
      %1374 = vmatprep.subr.bf16.mxu0 0
      %1375 = vmatpush1.bf16.msra.mxu0 0
      %1376 = vmatprep.subr.bf16.mxu0 0
      %1377 = vmatpush1.bf16.msra.mxu0 %v1312
      %1378 = vmatprep.subr.bf16.mxu0 0
      %1379 = vmatpush1.bf16.msra.mxu0 %v1311
      %1380 = vmatprep.subr.bf16.mxu0 0
      %1381 = vmatpush2.bf16.msra.mxu0 0
      %1382 = vmatprep.subr.bf16.mxu0 0
      %1383 = vmatpush2.bf16.msra.mxu0 0
      %1384 = vmatprep.subr.bf16.mxu0 0
      %1385 = vmatpush2.bf16.msra.mxu0 0
      %1386 = vmatprep.subr.bf16.mxu0 0
      %1387 = vmatpush2.bf16.msra.mxu0 0
      %1388 = vmatprep.subr.bf16.mxu0 0
      %1389 = vmatpush2.bf16.msra.mxu0 0
      %1390 = vmatprep.subr.bf16.mxu0 0
      %1391 = vmatpush2.bf16.msra.mxu0 0
      %1392 = vmatprep.subr.bf16.mxu0 0
      %1393 = vmatpush2.bf16.msra.mxu0 0
      %1394 = vmatprep.subr.bf16.mxu0 0
      %1395 = vmatpush2.bf16.msra.mxu0 0
      %1396 = vmatprep.mubr.bf16.mxu0 0
      %1397 = vmatmul.mubr.bf16.gmra.mxu0 %v1317
      %v1398 = vpop.f32.mrf.mxu0
      %v1399 = vadd.f32 %v1301, %v1398
      %v1400 = vpop.f32.mrf.mxu0
      %v1401 = vpop.f32.mrf.mxu0
      %v1402 = vadd.f32 %v1301, %v1401
      %v1403 = vpop.f32.mrf.mxu0
      %1404 = vmatprep.mubr.bf16.mxu0 0
      %1405 = vmatmul.mubr.bf16.gmra.mxu0 %v1320
      %v1406 = vpop.f32.mrf.mxu0
      %v1407 = vadd.f32 %v1301, %v1406
      %v1408 = vpop.f32.mrf.mxu0
      %v1409 = vpop.f32.mrf.mxu0
      %v1410 = vadd.f32 %v1301, %v1409
      %v1411 = vpop.f32.mrf.mxu0
      %1412 = vmatprep.mubr.bf16.mxu0 0
      %1413 = vmatmul.mubr.bf16.gmra.mxu0 %v1323
      %v1414 = vpop.f32.mrf.mxu0
      %v1415 = vadd.f32 %v1301, %v1414
      %v1416 = vpop.f32.mrf.mxu0
      %v1417 = vpop.f32.mrf.mxu0
      %v1418 = vadd.f32 %v1301, %v1417
      %v1419 = vpop.f32.mrf.mxu0
      %1420 = vmatprep.mubr.bf16.mxu0 0
      %1421 = vmatmul.mubr.bf16.gmra.mxu0 %v1326
      %v1422 = vpop.f32.mrf.mxu0
      %v1423 = vadd.f32 %v1301, %v1422
      %v1424 = vpop.f32.mrf.mxu0
      %v1425 = vpop.f32.mrf.mxu0
      %v1426 = vadd.f32 %v1301, %v1425
      %v1427 = vpop.f32.mrf.mxu0
      %1428 = vmatprep.mubr.bf16.mxu0 0
      %1429 = vmatmul.mubr.bf16.gmra.mxu0 %v1329
      %v1430 = vpop.f32.mrf.mxu0
      %v1431 = vadd.f32 %v1301, %v1430
      %v1432 = vpop.f32.mrf.mxu0
      %v1433 = vpop.f32.mrf.mxu0
      %v1434 = vadd.f32 %v1301, %v1433
      %v1435 = vpop.f32.mrf.mxu0
      %1436 = vmatprep.mubr.bf16.mxu0 0
      %1437 = vmatmul.mubr.bf16.gmra.mxu0 %v1332
      %v1438 = vpop.f32.mrf.mxu0
      %v1439 = vadd.f32 %v1301, %v1438
      %v1440 = vpop.f32.mrf.mxu0
      %v1441 = vpop.f32.mrf.mxu0
      %v1442 = vadd.f32 %v1301, %v1441
      %v1443 = vpop.f32.mrf.mxu0
      %1444 = vmatprep.mubr.bf16.mxu0 0
      %1445 = vmatmul.mubr.bf16.gmra.mxu0 %v1335
      %v1446 = vpop.f32.mrf.mxu0
      %v1447 = vadd.f32 %v1301, %v1446
      %v1448 = vpop.f32.mrf.mxu0
      %v1449 = vpop.f32.mrf.mxu0
      %v1450 = vadd.f32 %v1301, %v1449
      %v1451 = vpop.f32.mrf.mxu0
      %1452 = vmatprep.mubr.bf16.mxu0 0
      %1453 = vmatmul.mubr.bf16.gmra.mxu0 %v1338
      %v1454 = vpop.f32.mrf.mxu0
      %v1455 = vadd.f32 %v1301, %v1454
      %v1456 = vpop.f32.mrf.mxu0
      %v1457 = vpop.f32.mrf.mxu0
      %v1458 = vadd.f32 %v1301, %v1457
      %v1459 = vpop.f32.mrf.mxu0
      %1460 = vmatprep.mubr.bf16.mxu0 0
      %1461 = vmatmul.mubr.bf16.gmra.mxu0 %v1341
      %v1462 = vpop.f32.mrf.mxu0
      %v1463 = vadd.f32 %v1301, %v1462
      %v1464 = vpop.f32.mrf.mxu0
      %v1465 = vpop.f32.mrf.mxu0
      %v1466 = vadd.f32 %v1301, %v1465
      %v1467 = vpop.f32.mrf.mxu0
      %1468 = vmatprep.mubr.bf16.mxu0 0
      %1469 = vmatmul.mubr.bf16.gmra.mxu0 %v1344
      %v1470 = vpop.f32.mrf.mxu0
      %v1471 = vadd.f32 %v1301, %v1470
      %v1472 = vpop.f32.mrf.mxu0
      %v1473 = vpop.f32.mrf.mxu0
      %v1474 = vadd.f32 %v1301, %v1473
      %v1475 = vpop.f32.mrf.mxu0
      %1476 = vmatprep.mubr.bf16.mxu0 0
      %1477 = vmatmul.mubr.bf16.gmra.mxu0 %v1347
      %v1478 = vpop.f32.mrf.mxu0
      %v1479 = vadd.f32 %v1301, %v1478
      %v1480 = vpop.f32.mrf.mxu0
      %v1481 = vpop.f32.mrf.mxu0
      %v1482 = vadd.f32 %v1301, %v1481
      %v1483 = vpop.f32.mrf.mxu0
      %1484 = vmatprep.mubr.bf16.mxu0 0
      %1485 = vmatmul.mubr.bf16.gmra.mxu0 %v1350
      %v1486 = vpop.f32.mrf.mxu0
      %v1487 = vadd.f32 %v1301, %v1486
      %v1488 = vpop.f32.mrf.mxu0
      %v1489 = vpop.f32.mrf.mxu0
      %v1490 = vadd.f32 %v1301, %v1489
      %v1491 = vpop.f32.mrf.mxu0
      %1492 = vmatprep.mubr.bf16.mxu0 0
      %1493 = vmatmul.mubr.bf16.gmra.mxu0 %v1353
      %v1494 = vpop.f32.mrf.mxu0
      %v1495 = vadd.f32 %v1301, %v1494
      %v1496 = vpop.f32.mrf.mxu0
      %v1497 = vpop.f32.mrf.mxu0
      %v1498 = vadd.f32 %v1301, %v1497
      %v1499 = vpop.f32.mrf.mxu0
      %1500 = vmatprep.mubr.bf16.mxu0 0
      %1501 = vmatmul.mubr.bf16.gmra.mxu0 %v1356
      %v1502 = vpop.f32.mrf.mxu0
      %v1503 = vadd.f32 %v1301, %v1502
      %v1504 = vpop.f32.mrf.mxu0
      %v1505 = vpop.f32.mrf.mxu0
      %v1506 = vadd.f32 %v1301, %v1505
      %v1507 = vpop.f32.mrf.mxu0
      %1508 = vmatprep.mubr.bf16.mxu0 0
      %1509 = vmatmul.mubr.bf16.gmra.mxu0 %v1359
      %v1510 = vpop.f32.mrf.mxu0
      %v1511 = vadd.f32 %v1301, %v1510
      %v1512 = vpop.f32.mrf.mxu0
      %v1513 = vpop.f32.mrf.mxu0
      %v1514 = vadd.f32 %v1301, %v1513
      %v1515 = vpop.f32.mrf.mxu0
      %1516 = vmatprep.mubr.bf16.mxu0 0
      %1517 = vmatmul.mubr.bf16.gmra.mxu0 %v1362
      %v1518 = vpop.f32.mrf.mxu0
      %v1519 = vadd.f32 %v1301, %v1518
      %v1520 = vpop.f32.mrf.mxu0
      %v1521 = vpop.f32.mrf.mxu0
      %v1522 = vadd.f32 %v1301, %v1521
      %v1523 = vpop.f32.mrf.mxu0
      %1524 = vdwg.mxu0
      %v1525 = vadd.f32 %v779, %v1399
      %v1526 = vadd.f32 %v780, %v1402
      %v1527 = vadd.f32 %v781, %v1407
      %v1528 = vadd.f32 %v782, %v1410
      %v1529 = vadd.f32 %v783, %v1415
      %v1530 = vadd.f32 %v784, %v1418
      %v1531 = vadd.f32 %v785, %v1423
      %v1532 = vadd.f32 %v786, %v1426
      %v1533 = vadd.f32 %v787, %v1431
      %v1534 = vadd.f32 %v788, %v1434
      %v1535 = vadd.f32 %v789, %v1439
      %v1536 = vadd.f32 %v790, %v1442
      %v1537 = vadd.f32 %v791, %v1447
      %v1538 = vadd.f32 %v792, %v1450
      %v1539 = vadd.f32 %v793, %v1455
      %v1540 = vadd.f32 %v794, %v1458
      %v1541 = vadd.f32 %v795, %v1463
      %v1542 = vadd.f32 %v796, %v1466
      %v1543 = vadd.f32 %v797, %v1471
      %v1544 = vadd.f32 %v798, %v1474
      %v1545 = vadd.f32 %v799, %v1479
      %v1546 = vadd.f32 %v800, %v1482
      %v1547 = vadd.f32 %v801, %v1487
      %v1548 = vadd.f32 %v802, %v1490
      %v1549 = vadd.f32 %v803, %v1495
      %v1550 = vadd.f32 %v804, %v1498
      %v1551 = vadd.f32 %v805, %v1503
      %v1552 = vadd.f32 %v806, %v1506
      %v1553 = vadd.f32 %v807, %v1511
      %v1554 = vadd.f32 %v808, %v1514
      %v1555 = vadd.f32 %v809, %v1519
      %v1556 = vadd.f32 %v810, %v1522
      %v1557 = vpack.c.bf16 %v1526, %v1525
      %v1558 = vpack.c.bf16 %v1528, %v1527
      %v1559 = vpack.c.bf16 %v1530, %v1529
      %v1560 = vpack.c.bf16 %v1532, %v1531
      %v1561 = vpack.c.bf16 %v1534, %v1533
      %v1562 = vpack.c.bf16 %v1536, %v1535
      %v1563 = vpack.c.bf16 %v1538, %v1537
      %v1564 = vpack.c.bf16 %v1540, %v1539
      %v1565 = vpack.c.bf16 %v1542, %v1541
      %v1566 = vpack.c.bf16 %v1544, %v1543
      %v1567 = vpack.c.bf16 %v1546, %v1545
      %v1568 = vpack.c.bf16 %v1548, %v1547
      %v1569 = vpack.c.bf16 %v1550, %v1549
      %v1570 = vpack.c.bf16 %v1552, %v1551
      %v1571 = vpack.c.bf16 %v1554, %v1553
      %v1572 = vpack.c.bf16 %v1556, %v1555
      %v1589 = vunpack.c.l.b16 %v1557
      %v1590 = vunpack.c.h.b16 %v1557
      %v1591 = vunpack.c.l.b16 %v1558
      %v1592 = vunpack.c.h.b16 %v1558
      %v1593 = vunpack.c.l.b16 %v1559
      %v1594 = vunpack.c.h.b16 %v1559
      %v1595 = vunpack.c.l.b16 %v1560
      %v1596 = vunpack.c.h.b16 %v1560
      %v1597 = vunpack.c.l.b16 %v1561
      %v1598 = vunpack.c.h.b16 %v1561
      %v1599 = vunpack.c.l.b16 %v1562
      %v1600 = vunpack.c.h.b16 %v1562
      %v1601 = vunpack.c.l.b16 %v1563
      %v1602 = vunpack.c.h.b16 %v1563
      %v1603 = vunpack.c.l.b16 %v1564
      %v1604 = vunpack.c.h.b16 %v1564
      %v1605 = vunpack.c.l.b16 %v1565
      %v1606 = vunpack.c.h.b16 %v1565
      %v1607 = vunpack.c.l.b16 %v1566
      %v1608 = vunpack.c.h.b16 %v1566
      %v1609 = vunpack.c.l.b16 %v1567
      %v1610 = vunpack.c.h.b16 %v1567
      %v1611 = vunpack.c.l.b16 %v1568
      %v1612 = vunpack.c.h.b16 %v1568
      %v1613 = vunpack.c.l.b16 %v1569
      %v1614 = vunpack.c.h.b16 %v1569
      %v1615 = vunpack.c.l.b16 %v1570
      %v1616 = vunpack.c.h.b16 %v1570
      %v1617 = vunpack.c.l.b16 %v1571
      %v1618 = vunpack.c.h.b16 %v1571
      %v1619 = vunpack.c.l.b16 %v1572
      %v1620 = vunpack.c.h.b16 %v1572
      %v1621 = vpack.c.b16 %v1589, %v1589
      %v1622 = vpack.c.b16 %v1590, %v1590
      %v1623 = vpack.c.b16 %v1591, %v1591
      %v1624 = vpack.c.b16 %v1592, %v1592
      %v1625 = vpack.c.b16 %v1593, %v1593
      %v1626 = vpack.c.b16 %v1594, %v1594
      %v1627 = vpack.c.b16 %v1595, %v1595
      %v1628 = vpack.c.b16 %v1596, %v1596
      %v1629 = vpack.c.b16 %v1597, %v1597
      %v1630 = vpack.c.b16 %v1598, %v1598
      %v1631 = vpack.c.b16 %v1599, %v1599
      %v1632 = vpack.c.b16 %v1600, %v1600
      %v1633 = vpack.c.b16 %v1601, %v1601
      %v1634 = vpack.c.b16 %v1602, %v1602
      %v1635 = vpack.c.b16 %v1603, %v1603
      %v1636 = vpack.c.b16 %v1604, %v1604
      %v1637 = vpack.c.b16 %v1605, %v1605
      %v1638 = vpack.c.b16 %v1606, %v1606
      %v1639 = vpack.c.b16 %v1607, %v1607
      %v1640 = vpack.c.b16 %v1608, %v1608
      %v1641 = vpack.c.b16 %v1609, %v1609
      %v1642 = vpack.c.b16 %v1610, %v1610
      %v1643 = vpack.c.b16 %v1611, %v1611
      %v1644 = vpack.c.b16 %v1612, %v1612
      %v1645 = vpack.c.b16 %v1613, %v1613
      %v1646 = vpack.c.b16 %v1614, %v1614
      %v1647 = vpack.c.b16 %v1615, %v1615
      %v1648 = vpack.c.b16 %v1616, %v1616
      %v1649 = vpack.c.b16 %v1617, %v1617
      %v1650 = vpack.c.b16 %v1618, %v1618
      %v1651 = vpack.c.b16 %v1619, %v1619
      %v1652 = vpack.c.b16 %v1620, %v1620
      %vm1685 = vcmask 125952
      %1686 = vst.msk [vmem:[%s336] sm:$0xf] %vm1685, %v1621
      %1687 = vst.msk [vmem:[%s336 + $0x4] sm:$0xf] %vm1685, %v1622
      %1688 = vst.msk [vmem:[%s336 + $0x8] sm:$0xf] %vm1685, %v1623
      %1689 = vst.msk [vmem:[%s336 + $0xc] sm:$0xf] %vm1685, %v1624
      %1690 = vst.msk [vmem:[%s336 + $0x10] sm:$0xf] %vm1685, %v1625
      %1691 = vst.msk [vmem:[%s336 + $0x14] sm:$0xf] %vm1685, %v1626
      %1692 = vst.msk [vmem:[%s336 + $0x18] sm:$0xf] %vm1685, %v1627
      %1693 = vst.msk [vmem:[%s336 + $0x1c] sm:$0xf] %vm1685, %v1628
      %1694 = vst.msk [vmem:[%s336 + $0x20] sm:$0xf] %vm1685, %v1629
      %1695 = vst.msk [vmem:[%s336 + $0x24] sm:$0xf] %vm1685, %v1630
      %1696 = vst.msk [vmem:[%s336 + $0x28] sm:$0xf] %vm1685, %v1631
      %1697 = vst.msk [vmem:[%s336 + $0x2c] sm:$0xf] %vm1685, %v1632
      %1698 = vst.msk [vmem:[%s336 + $0x30] sm:$0xf] %vm1685, %v1633
      %1699 = vst.msk [vmem:[%s336 + $0x34] sm:$0xf] %vm1685, %v1634
      %1700 = vst.msk [vmem:[%s336 + $0x38] sm:$0xf] %vm1685, %v1635
      %1701 = vst.msk [vmem:[%s336 + $0x3c] sm:$0xf] %vm1685, %v1636
      %1702 = vst.msk [vmem:[%s336 + $0x40] sm:$0xf] %vm1685, %v1637
      %1703 = vst.msk [vmem:[%s336 + $0x44] sm:$0xf] %vm1685, %v1638
      %1704 = vst.msk [vmem:[%s336 + $0x48] sm:$0xf] %vm1685, %v1639
      %1705 = vst.msk [vmem:[%s336 + $0x4c] sm:$0xf] %vm1685, %v1640
      %1706 = vst.msk [vmem:[%s336 + $0x50] sm:$0xf] %vm1685, %v1641
      %1707 = vst.msk [vmem:[%s336 + $0x54] sm:$0xf] %vm1685, %v1642
      %1708 = vst.msk [vmem:[%s336 + $0x58] sm:$0xf] %vm1685, %v1643
      %1709 = vst.msk [vmem:[%s336 + $0x5c] sm:$0xf] %vm1685, %v1644
      %1710 = vst.msk [vmem:[%s336 + $0x60] sm:$0xf] %vm1685, %v1645
      %1711 = vst.msk [vmem:[%s336 + $0x64] sm:$0xf] %vm1685, %v1646
      %1712 = vst.msk [vmem:[%s336 + $0x68] sm:$0xf] %vm1685, %v1647
      %1713 = vst.msk [vmem:[%s336 + $0x6c] sm:$0xf] %vm1685, %v1648
      %1714 = vst.msk [vmem:[%s336 + $0x70] sm:$0xf] %vm1685, %v1649
      %1715 = vst.msk [vmem:[%s336 + $0x74] sm:$0xf] %vm1685, %v1650
      %1716 = vst.msk [vmem:[%s336 + $0x78] sm:$0xf] %vm1685, %v1651
      %1717 = vst.msk [vmem:[%s336 + $0x7c] sm:$0xf] %vm1685, %v1652
      %s1718 = smul.u32 32, %s23
      %p1719 = scmp.lt.s32.totalorder %s22, 1
      %s1720 = scalar_select %p1719, %s22, 1
      %p1721 = scmp.lt.s32.totalorder %s1718, 31
      %s1722 = scalar_select %p1721, %s1718, 31
      %s1723 = smul.addr %s1720, 32
      %s1724 = sadd.s32 %s1722, %s1723
      %s1725 = smul.addr %s1724, 4
      %s1726 = scalar_lea.vmem %s7, %s1725
      // Predicated region
      $region49: #{psa_block_forward.3} parent=47 // pred_check
        %p1727 = pneg %p209
      $region50: #{psa_block_forward.3} parent=47 // pred_check_branch
        %1729 = sbr.rel (%p1727) target = $region52
      $region51: #{psa_block_forward.3} parent=47 // pred_region
        %s1730 = smul.u32 32, %s23
      $region52: #{psa_block_forward.3} parent=47 // pred_fallthru
        _
    $region48: #{psa_block_forward.3} parent=5 // pred_fallthru
      _
    %p1731 = scmp.le.s32.totalorder 2, %s13
    // Predicated region
    $region53: #{psa_block_forward.3} parent=5 // pred_check
      %p1732 = pneg %p1731
    $region54: #{psa_block_forward.3} parent=5 // pred_check_branch
      %1734 = sbr.rel (%p1732) target = $region56
    $region55: #{psa_block_forward.3} parent=5 // pred_region
      %s1735 = ssub.s32 %s13, 2
      // Predicated region
      $region57: #{psa_block_forward.3} parent=55 // pred_check
        %p1736 = pneg %p215
      $region58: #{psa_block_forward.3} parent=55 // pred_check_branch
        %1738 = sbr.rel (%p1736) target = $region60
      $region59: #{psa_block_forward.3} parent=55 // pred_region
        %s1739 = smul.u32 32, %s25
        %p1740 = scmp.lt.s32.totalorder %s24, 1
        %s1741 = scalar_select %p1740, %s24, 1
        %p1742 = scmp.lt.s32.totalorder %s1739, 31
        %s1743 = scalar_select %p1742, %s1739, 31
        %s1744 = smul.addr %s1741, 32
        %s1745 = sadd.s32 %s1743, %s1744
        %s1746 = smul.addr %s1745, 4
        %s1747 = scalar_lea.vmem %s7, %s1746
      $region60: #{psa_block_forward.3} parent=55 // pred_fallthru
        _
    $region56: #{psa_block_forward.3} parent=5 // pred_fallthru
      _
  $region6: #{psa_block_forward.3} parent=0 // loop_footer
    %s17 = sadd.s32 1, %s13
  $region7: #{psa_block_forward.3} parent=0 // loop_footer_branch
    %12 = sbr.rel target = $region3
  $region8: #{psa_block_forward.3} parent=0 // loop_exit
    _

</llo_original>
